<compile_context>
chip_gen: v7x
topology: tpu7x:2x2x1
jax: 0.10.0
libtpu: 0.0.40
codegen_flags: <defaults>
</compile_context>

<pallas_src>
import math

import jax
import jax.numpy as jnp
from jax.experimental import pallas as pl
from jax.experimental.pallas import tpu as pltpu

EPSILON = 1e-6
_MAX_ROW_TILE = 1024


def _vmem_budgets():
    """Generation-aware VMEM budgets (v5e/v6e: 128 MiB phys, v7x: 64 MiB)."""
    try:
        phys = int(pltpu.get_tpu_info().vmem_capacity_bytes)
    except Exception:
        phys = 64 * 1024 * 1024          # conservative (v7x-sized) fallback
    limit = max(phys - phys // 4, 32 * 1024 * 1024)   # 96 MiB v5e/v6e, 48 MiB v7x
    tile_budget = limit // 3
    return tile_budget, limit


_VMEM_TILE_BUDGET, _VMEM_LIMIT_BYTES = _vmem_budgets()


def _compiler_params(dim_sem):
    return pltpu.CompilerParams(
        dimension_semantics=dim_sem,
        vmem_limit_bytes=_VMEM_LIMIT_BYTES,
    )


def _sublane(dtype):
    """Dtype-aware sublane multiple: 8 for f32, 16 for bf16, 32 for int8."""
    return max(8, 32 // jnp.dtype(dtype).itemsize)


def _mm_dtype(dtype):
    """MXU operand dtype: bf16 activations use bf16 operands (full-rate MXU on
    v6e/v7x); f32 activations keep f32 operands to match reference numerics."""
    return jnp.bfloat16 if jnp.dtype(dtype) == jnp.bfloat16 else jnp.float32


def _choose_row_tile(rows, per_row_bytes, resident_bytes, sublane):
    """Largest sublane-aligned row tile that fits the VMEM working-set budget."""
    budget = max(_VMEM_TILE_BUDGET - resident_bytes, 1 << 20)
    tile = budget // max(per_row_bytes, 1)
    tile = int(min(tile, _MAX_ROW_TILE, max(rows, sublane)))
    return max(sublane, (tile // sublane) * sublane)


def _layernorm_f32(x, alpha, bias):
    """Scalar-parameter LayerNorm matching torch: unbiased std, eps added to std."""
    d = x.shape[-1]
    mean = jnp.mean(x, axis=-1, keepdims=True)
    diff = x - mean
    var = jnp.sum(diff * diff, axis=-1, keepdims=True) / jnp.float32(d - 1)
    inv = pl.reciprocal(jnp.sqrt(var) + jnp.float32(EPSILON), approx=False)
    return alpha * diff * inv + bias


def _ln_vec(ln):
    return jnp.stack([jnp.asarray(ln[0], jnp.float32).reshape(()),
                      jnp.asarray(ln[1], jnp.float32).reshape(())])


def _attend(q, k, v, mask2d, num_heads, mm):
    """Head-batched attention core.

    q: (Sq, D), k/v: (Sk, D), mask2d: (M, Sk) with M in {1, Sq}.
    Heads are staged into (H, S, dh) with cheap lane slices, then QK^T and PV run
    as single batched einsums (one live (H,Sq,Sk) score tensor, no per-head
    matmul/accumulate loop).  Returns the concatenated heads (Sq, D).
    """
    Sq, D = q.shape
    dh = D // num_heads
    scale = 1.0 / math.sqrt(dh)

    def split(t):
        return jnp.stack([t[:, h * dh:(h + 1) * dh] for h in range(num_heads)],
                         axis=0)                                   # (H, S, dh)

    qh, kh, vh = split(q), split(k), split(v)
    s = jnp.einsum("hqd,hkd->hqk", qh.astype(mm), kh.astype(mm),
                   preferred_element_type=jnp.float32) * scale     # (H, Sq, Sk)
    s = jnp.where((mask2d == 0)[None, :, :], -jnp.inf, s)
    s_max = jnp.max(s, axis=-1, keepdims=True)
    p = jnp.exp(s - s_max)
    p = p * pl.reciprocal(jnp.sum(p, axis=-1, keepdims=True), approx=False)
    o = jnp.einsum("hqk,hkd->hqd", p.astype(mm), vh.astype(mm),
                   preferred_element_type=jnp.float32)             # (H, Sq, dh)
    return jnp.concatenate([o[h] for h in range(num_heads)], axis=-1)  # (Sq, D)


def fused_self_attention(x, mask, ln, wq, bq, wk, bk, wv, bv, wo, bo, num_heads):
    """LN -> fused (D,3D) QKV projection -> MHA -> out-proj -> +residual,
    all in one kernel (one grid step per batch element)."""
    B, S, D = x.shape
    M = mask.shape[1]
    mm = _mm_dtype(x.dtype)
    wqkv = jnp.concatenate([wq, wk, wv], axis=1)                    # (D, 3D)
    bqkv = jnp.concatenate(
        [jnp.ravel(bq), jnp.ravel(bk), jnp.ravel(bv)]).astype(jnp.float32).reshape(1, 3 * D)

    def kernel(ln_ref, x_ref, m_ref, wqkv_ref, bqkv_ref, wo_ref, bo_ref, o_ref):
        xres = x_ref[0].astype(jnp.float32)
        h = _layernorm_f32(xres, ln_ref[0], ln_ref[1])
        qkv = jnp.dot(h.astype(mm), wqkv_ref[...].astype(mm),
                      preferred_element_type=jnp.float32) + bqkv_ref[...]
        q, k, v = qkv[:, :D], qkv[:, D:2 * D], qkv[:, 2 * D:]
        attn = _attend(q, k, v, m_ref[0], num_heads, mm)
        out = jnp.dot(attn.astype(mm), wo_ref[...].astype(mm),
                      preferred_element_type=jnp.float32) + bo_ref[...] + xres
        o_ref[0] = out.astype(o_ref.dtype)

    return pl.pallas_call(
        kernel,
        out_shape=jax.ShapeDtypeStruct((B, S, D), x.dtype),
        grid_spec=pltpu.PrefetchScalarGridSpec(
            num_scalar_prefetch=0,
            grid=(B,),
            in_specs=[
                pl.BlockSpec(memory_space=pltpu.MemorySpace.SMEM),
                pl.BlockSpec((1, S, D), lambda b: (b, 0, 0)),
                pl.BlockSpec((1, M, S), lambda b: (b, 0, 0)),
                pl.BlockSpec((D, 3 * D), lambda b: (0, 0)),
                pl.BlockSpec((1, 3 * D), lambda b: (0, 0)),
                pl.BlockSpec((D, D), lambda b: (0, 0)),
                pl.BlockSpec((1, D), lambda b: (0, 0)),
            ],
            out_specs=pl.BlockSpec((1, S, D), lambda b: (b, 0, 0)),
        ),
        compiler_params=_compiler_params(("parallel",)),
    )(_ln_vec(ln), x, mask, wqkv, bqkv, wo,
      jnp.asarray(bo, jnp.float32).reshape(1, D))


def fused_cross_attention(x, enc, mask, ln, wq, bq, wk, bk, wv, bv, wo, bo,
                          num_heads):
    """LN(x) -> Q projection; encoder_output -> fused (D,2D) KV projection;
    MHA -> out-proj -> +residual, all in one kernel."""
    B, S, D = x.shape
    Sk = enc.shape[1]
    M = mask.shape[1]
    mm = _mm_dtype(x.dtype)
    wkv = jnp.concatenate([wk, wv], axis=1)                          # (D, 2D)
    bkv = jnp.concatenate(
        [jnp.ravel(bk), jnp.ravel(bv)]).astype(jnp.float32).reshape(1, 2 * D)

    def kernel(ln_ref, x_ref, e_ref, m_ref, wq_ref, bq_ref, wkv_ref, bkv_ref,
               wo_ref, bo_ref, o_ref):
        xres = x_ref[0].astype(jnp.float32)
        h = _layernorm_f32(xres, ln_ref[0], ln_ref[1])
        q = jnp.dot(h.astype(mm), wq_ref[...].astype(mm),
                    preferred_element_type=jnp.float32) + bq_ref[...]
        enc_b = e_ref[0].astype(jnp.float32)
        kv = jnp.dot(enc_b.astype(mm), wkv_ref[...].astype(mm),
                     preferred_element_type=jnp.float32) + bkv_ref[...]
        k, v = kv[:, :D], kv[:, D:]
        attn = _attend(q, k, v, m_ref[0], num_heads, mm)
        out = jnp.dot(attn.astype(mm), wo_ref[...].astype(mm),
                      preferred_element_type=jnp.float32) + bo_ref[...] + xres
        o_ref[0] = out.astype(o_ref.dtype)

    return pl.pallas_call(
        kernel,
        out_shape=jax.ShapeDtypeStruct((B, S, D), x.dtype),
        grid_spec=pltpu.PrefetchScalarGridSpec(
            num_scalar_prefetch=0,
            grid=(B,),
            in_specs=[
                pl.BlockSpec(memory_space=pltpu.MemorySpace.SMEM),
                pl.BlockSpec((1, S, D), lambda b: (b, 0, 0)),
                pl.BlockSpec((1, Sk, D), lambda b: (b, 0, 0)),
                pl.BlockSpec((1, M, Sk), lambda b: (b, 0, 0)),
                pl.BlockSpec((D, D), lambda b: (0, 0)),
                pl.BlockSpec((1, D), lambda b: (0, 0)),
                pl.BlockSpec((D, 2 * D), lambda b: (0, 0)),
                pl.BlockSpec((1, 2 * D), lambda b: (0, 0)),
                pl.BlockSpec((D, D), lambda b: (0, 0)),
                pl.BlockSpec((1, D), lambda b: (0, 0)),
            ],
            out_specs=pl.BlockSpec((1, S, D), lambda b: (b, 0, 0)),
        ),
        compiler_params=_compiler_params(("parallel",)),
    )(_ln_vec(ln), x, enc, mask, wq, jnp.asarray(bq, jnp.float32).reshape(1, D),
      wkv, bkv, wo, jnp.asarray(bo, jnp.float32).reshape(1, D))


def fused_ffn_residual(x, w1, b1, w2, b2, ln):
    """out[b] = x[b] + FFN(LN(x[0]))  (reference's `[0]` batch-0 broadcast quirk).

    The FFN is computed ONCE (only at the b==0 grid step, into a VMEM scratch)
    and the broadcast residual add is fused into the same kernel's epilogue, so
    there is no separate add kernel and no HBM round trip of the FFN output.
    Grid = (row-tiles of S, B); B is the inner, sequential axis so the scratch
    written at b==0 is valid for every b of the same row tile.
    """
    B, S, D = x.shape
    F = int(w1.shape[1])
    mm = _mm_dtype(x.dtype)

    sub = _sublane(x.dtype)
    per_row = 4 * (4 * D + D + 2 * F)     # in/out double-buffered + scratch + hidden
    resident = 2 * 4 * (int(w1.size) + int(w2.size))
    ts = _choose_row_tile(S, per_row, resident, sub)
    n_s = pl.cdiv(S, ts)
    s_pad = n_s * ts
    if s_pad != S:
        x = jnp.pad(x, ((0, 0), (0, s_pad - S), (0, 0)))

    def kernel(ln_ref, x_ref, w1_ref, b1_ref, w2_ref, b2_ref, o_ref, ffn0):
        @pl.when(pl.program_id(1) == 0)       # batch-0 step: compute the FFN tile
        def _():
            h = _layernorm_f32(x_ref[0].astype(jnp.float32), ln_ref[0], ln_ref[1])
            h = jnp.maximum(
                jnp.dot(h.astype(mm), w1_ref[...].astype(mm),
                        preferred_element_type=jnp.float32) + b1_ref[...], 0.0)
            ffn0[...] = jnp.dot(h.astype(mm), w2_ref[...].astype(mm),
                                preferred_element_type=jnp.float32) + b2_ref[...]
        o_ref[0] = (x_ref[0].astype(jnp.float32) + ffn0[...]).astype(o_ref.dtype)

    out = pl.pallas_call(
        kernel,
        out_shape=jax.ShapeDtypeStruct((B, s_pad, D), x.dtype),
        grid_spec=pltpu.PrefetchScalarGridSpec(
            num_scalar_prefetch=0,
            grid=(n_s, B),
            in_specs=[
                pl.BlockSpec(memory_space=pltpu.MemorySpace.SMEM),
                pl.BlockSpec((1, ts, D), lambda s, b: (b, s, 0)),
                pl.BlockSpec((D, F), lambda s, b: (0, 0)),
                pl.BlockSpec((1, F), lambda s, b: (0, 0)),
                pl.BlockSpec((F, D), lambda s, b: (0, 0)),
                pl.BlockSpec((1, D), lambda s, b: (0, 0)),
            ],
            out_specs=pl.BlockSpec((1, ts, D), lambda s, b: (b, s, 0)),
            scratch_shapes=[pltpu.VMEM((ts, D), jnp.float32)],
        ),
        # Both axes "arbitrary": the scratch carry requires the sequential b loop.
        compiler_params=_compiler_params(("arbitrary", "arbitrary")),
    )(_ln_vec(ln), x, w1, jnp.asarray(b1, jnp.float32).reshape(1, F),
      w2, jnp.asarray(b2, jnp.float32).reshape(1, D))
    return out[:, :S]


def _prep_mask(mask, B, Sk):
    """(B,1,1,Sk) -> (B,1,Sk) row mask; (B,1,Sq,Sk) -> (B,Sq,Sk).

    No broadcasting to (B,Sq,Sk) for row masks -- the broadcast happens inside
    the attention kernel, so no extra (B,S,S) f32 tensor is materialized in HBM.
    """
    return jnp.asarray(mask, jnp.float32).reshape(B, -1, Sk)


class DecoderBlock:
    """JAX/Pallas port of the PyTorch DecoderBlock forward (inference)."""

    def __init__(self, params, num_heads):
        self.p = params
        self.num_heads = num_heads

    def __call__(self, x, encoder_output, source_mask, target_mask):
        p = self.p
        B, S, D = x.shape
        tgt_m = _prep_mask(target_mask, B, S)
        src_m = _prep_mask(source_mask, B, encoder_output.shape[1])

        # --- Residual 1: self-attention (pre-LN + QKV + MHA + out-proj fused) ---
        x1 = fused_self_attention(
            x, tgt_m, (p["ln1_a"], p["ln1_b"]),
            p["Wq1"], p["bq1"], p["Wk1"], p["bk1"], p["Wv1"], p["bv1"],
            p["Wo1"], p["bo1"], self.num_heads)

        # --- Residual 2: cross-attention (pre-LN Q + encoder KV + MHA fused) ---
        x2 = fused_cross_attention(
            x1, encoder_output, src_m, (p["ln2_a"], p["ln2_b"]),
            p["Wq2"], p["bq2"], p["Wk2"], p["bk2"], p["Wv2"], p["bv2"],
            p["Wo2"], p["bo2"], self.num_heads)

        # --- Residual 3: feed-forward on batch 0 only + fused broadcast add ---
        return fused_ffn_residual(x2, p["W1"], p["b1"], p["W2"], p["b2"],
                                  (p["ln3_a"], p["ln3_b"]))


def init_decoder_block_params(key, d_model, num_heads, ffn_dim):
    assert d_model % num_heads == 0
    keys = jax.random.split(key, 10)

    def linear(k, d_in, d_out):
        kw, kb = jax.random.split(k)
        bound = 1.0 / math.sqrt(d_in)
        # Weights stored as (in, out) so kernels compute x @ W + b
        # (equivalent to torch's x @ W.T + b with W stored (out, in)).
        w = jax.random.uniform(kw, (d_in, d_out), jnp.float32, -bound, bound)
        b = jax.random.uniform(kb, (d_out,), jnp.float32, -bound, bound)
        return w, b

    p = {}
    p["Wq1"], p["bq1"] = linear(keys[0], d_model, d_model)
    p["Wk1"], p["bk1"] = linear(keys[1], d_model, d_model)
    p["Wv1"], p["bv1"] = linear(keys[2], d_model, d_model)
    p["Wo1"], p["bo1"] = linear(keys[3], d_model, d_model)
    p["Wq2"], p["bq2"] = linear(keys[4], d_model, d_model)
    p["Wk2"], p["bk2"] = linear(keys[5], d_model, d_model)
    p["Wv2"], p["bv2"] = linear(keys[6], d_model, d_model)
    p["Wo2"], p["bo2"] = linear(keys[7], d_model, d_model)
    p["W1"], p["b1"] = linear(keys[8], d_model, ffn_dim)
    p["W2"], p["b2"] = linear(keys[9], ffn_dim, d_model)
    for i in (1, 2, 3):
        p[f"ln{i}_a"] = jnp.array(1.0, jnp.float32)
        p[f"ln{i}_b"] = jnp.array(0.0, jnp.float32)
    return p


# ---------------------- pure-JAX reference for verification ----------------------

def _ref_layernorm(x, alpha, bias):
    mean = x.mean(axis=-1, keepdims=True)
    std = jnp.sqrt(((x - mean) ** 2).sum(axis=-1, keepdims=True) / (x.shape[-1] - 1))
    return alpha * (x - mean) / (std + EPSILON) + bias


def _ref_mha(x_q, x_kv, mask, Wq, bq, Wk, bk, Wv, bv, Wo, bo, num_heads):
    B, S, D = x_q.shape
    Skv = x_kv.shape[1]
    dh = D // num_heads
    q = (x_q @ Wq + bq).reshape(B, S, num_heads, dh).transpose(0, 2, 1, 3)
    k = (x_kv @ Wk + bk).reshape(B, Skv, num_heads, dh).transpose(0, 2, 1, 3)
    v = (x_kv @ Wv + bv).reshape(B, Skv, num_heads, dh).transpose(0, 2, 1, 3)
    s = jnp.einsum("bhqd,bhkd->bhqk", q, k) / math.sqrt(dh)
    s = jnp.where(mask == 0, -jnp.inf, s)
    p = jax.nn.softmax(s, axis=-1)
    o = jnp.einsum("bhqk,bhkd->bhqd", p, v).transpose(0, 2, 1, 3).reshape(B, S, D)
    return o @ Wo + bo


def _ref_decoder_block(p, x, enc, source_mask, target_mask, num_heads):
    h = _ref_layernorm(x, p["ln1_a"], p["ln1_b"])
    x1 = x + _ref_mha(h, h, target_mask, p["Wq1"], p["bq1"], p["Wk1"], p["bk1"],
                      p["Wv1"], p["bv1"], p["Wo1"], p["bo1"], num_heads)
    h2 = _ref_layernorm(x1, p["ln2_a"], p["ln2_b"])
    x2 = x1 + _ref_mha(h2, enc, source_mask, p["Wq2"], p["bq2"], p["Wk2"], p["bk2"],
                       p["Wv2"], p["bv2"], p["Wo2"], p["bo2"], num_heads)
    h3 = _ref_layernorm(x2, p["ln3_a"], p["ln3_b"])
    ffn = jnp.maximum(h3 @ p["W1"] + p["b1"], 0.0) @ p["W2"] + p["b2"]
    return x2 + ffn[0]      # reference ResidualConnection `[0]` batch-0 broadcast quirk


if __name__ == "__main__":
    key = jax.random.PRNGKey(0)
    k_param, k_x, k_enc = jax.random.split(key, 3)

    batch, seq, d_model, num_heads, ffn_dim = 2, 8, 32, 4, 64

    params = init_decoder_block_params(k_param, d_model, num_heads, ffn_dim)
    x = jax.random.normal(k_x, (batch, seq, d_model), jnp.float32)
    encoder_output = jax.random.normal(k_enc, (batch, seq, d_model), jnp.float32)
    source_mask = jnp.ones((batch, 1, 1, seq), jnp.float32)
    target_mask = jnp.broadcast_to(
        jnp.tril(jnp.ones((seq, seq), jnp.float32))[None, None],
        (batch, 1, seq, seq))

    block = DecoderBlock(params, num_heads=num_heads)
    out = jax.block_until_ready(block(x, encoder_output, source_mask, target_mask))

    ref = _ref_decoder_block(params, x, encoder_output, source_mask, target_mask,
                             num_heads)
    assert out.shape == x.shape
    max_err = float(jnp.max(jnp.abs(out - ref)))
    assert jnp.allclose(out, ref, atol=5e-3, rtol=5e-3), f"mismatch vs ref: {max_err}"
    print("KERNEL_OK")
</pallas_src>

<mosaic_0001>
module attributes {stable_mosaic.version = 11 : i64} {
  func.func @kernel(%arg0: i32, %arg1: memref<2xf32, #tpu.memory_space<smem>>, %arg2: memref<1x8x32xf32, #tpu.memory_space<vmem>>, %arg3: memref<1x8x8xf32, #tpu.memory_space<vmem>>, %arg4: memref<32x96xf32, #tpu.memory_space<vmem>>, %arg5: memref<1x96xf32, #tpu.memory_space<vmem>>, %arg6: memref<32x32xf32, #tpu.memory_space<vmem>>, %arg7: memref<1x32xf32, #tpu.memory_space<vmem>>, %arg8: memref<1x8x32xf32, #tpu.memory_space<vmem>>) attributes {dimension_semantics = [#tpu.dimension_semantics<parallel>], iteration_bounds = array<i64: 2>, scalar_prefetch = 0 : i64, scratch_operands = 0 : i64, tpu.core_type = #tpu.core_type<tc>, window_params = [{transform_indices = @transform_0, window_bounds = array<i64: 2>}, {transform_indices = @transform_1, window_bounds = array<i64: 1, 8, 32>}, {transform_indices = @transform_2, window_bounds = array<i64: 1, 8, 8>}, {pipeline_mode = #tpu.pipeline_mode<synchronous>, transform_indices = @transform_3, window_bounds = array<i64: 32, 96>}, {pipeline_mode = #tpu.pipeline_mode<synchronous>, transform_indices = @transform_4, window_bounds = array<i64: 1, 96>}, {pipeline_mode = #tpu.pipeline_mode<synchronous>, transform_indices = @transform_5, window_bounds = array<i64: 32, 32>}, {pipeline_mode = #tpu.pipeline_mode<synchronous>, transform_indices = @transform_6, window_bounds = array<i64: 1, 32>}, {transform_indices = @transform_7, window_bounds = array<i64: 1, 8, 32>}]} {
    %c0 = arith.constant 0 : index
    %c0_0 = arith.constant 0 : index
    %c0_1 = arith.constant 0 : index
    %0 = vector.load %arg2[%c0, %c0_0, %c0_1] : memref<1x8x32xf32, #tpu.memory_space<vmem>>, vector<1x8x32xf32>
    %1 = vector.shape_cast %0 : vector<1x8x32xf32> to vector<8x32xf32>
    %c0_2 = arith.constant 0 : index
    %2 = memref.load %arg1[%c0_2] : memref<2xf32, #tpu.memory_space<smem>>
    %c1 = arith.constant 1 : index
    %3 = memref.load %arg1[%c1] : memref<2xf32, #tpu.memory_space<smem>>
    %cst = arith.constant dense<0.000000e+00> : vector<8xf32>
    %4 = vector.multi_reduction <add>, %1, %cst [1] : vector<8x32xf32> to vector<8xf32>
    %5 = vector.shape_cast %4 : vector<8xf32> to vector<8x1xf32>
    %cst_3 = arith.constant 3.200000e+01 : f32
    %6 = vector.broadcast %cst_3 : f32 to vector<8x1xf32>
    %7 = arith.divf %5, %6 : vector<8x1xf32>
    %8 = vector.broadcast %7 : vector<8x1xf32> to vector<8x32xf32>
    %9 = arith.subf %1, %8 : vector<8x32xf32>
    %10 = arith.mulf %9, %9 : vector<8x32xf32>
    %cst_4 = arith.constant dense<0.000000e+00> : vector<8xf32>
    %11 = vector.multi_reduction <add>, %10, %cst_4 [1] : vector<8x32xf32> to vector<8xf32>
    %12 = vector.shape_cast %11 : vector<8xf32> to vector<8x1xf32>
    %cst_5 = arith.constant 3.100000e+01 : f32
    %13 = vector.broadcast %cst_5 : f32 to vector<8x1xf32>
    %14 = arith.divf %12, %13 : vector<8x1xf32>
    %15 = math.sqrt %14 : vector<8x1xf32>
    %cst_6 = arith.constant 9.99999997E-7 : f32
    %16 = vector.broadcast %cst_6 : f32 to vector<8x1xf32>
    %17 = arith.addf %15, %16 : vector<8x1xf32>
    %18 = tpu.reciprocal %17 : vector<8x1xf32> -> vector<8x1xf32>
    %19 = vector.broadcast %2 : f32 to vector<8x32xf32>
    %20 = arith.mulf %19, %9 : vector<8x32xf32>
    %21 = vector.broadcast %18 : vector<8x1xf32> to vector<8x32xf32>
    %22 = arith.mulf %20, %21 : vector<8x32xf32>
    %23 = vector.broadcast %3 : f32 to vector<8x32xf32>
    %24 = arith.addf %22, %23 : vector<8x32xf32>
    %c0_7 = arith.constant 0 : index
    %c0_8 = arith.constant 0 : index
    %25 = vector.load %arg4[%c0_7, %c0_8] : memref<32x96xf32, #tpu.memory_space<vmem>>, vector<32x96xf32>
    %cst_9 = arith.constant dense<0.000000e+00> : vector<8x96xf32>
    %26 = tpu.matmul %24, %25, %cst_9 {dimension_numbers = #tpu.dot_dimension_numbers<[1], [0], [0], [1], [0, 0, 1, 1], [], []>} : vector<8x32xf32>, vector<32x96xf32>, vector<8x96xf32> -> vector<8x96xf32>
    %c0_10 = arith.constant 0 : index
    %c0_11 = arith.constant 0 : index
    %27 = vector.load %arg5[%c0_10, %c0_11] : memref<1x96xf32, #tpu.memory_space<vmem>>, vector<1x96xf32>
    %28 = vector.broadcast %27 : vector<1x96xf32> to vector<8x96xf32>
    %29 = arith.addf %26, %28 : vector<8x96xf32>
    %30 = vector.extract_strided_slice %29 {offsets = [0, 0], sizes = [8, 32], strides = [1, 1]} : vector<8x96xf32> to vector<8x32xf32>
    %31 = vector.extract_strided_slice %29 {offsets = [0, 32], sizes = [8, 32], strides = [1, 1]} : vector<8x96xf32> to vector<8x32xf32>
    %32 = vector.extract_strided_slice %29 {offsets = [0, 64], sizes = [8, 32], strides = [1, 1]} : vector<8x96xf32> to vector<8x32xf32>
    %c0_12 = arith.constant 0 : index
    %c0_13 = arith.constant 0 : index
    %c0_14 = arith.constant 0 : index
    %33 = vector.load %arg3[%c0_12, %c0_13, %c0_14] : memref<1x8x8xf32, #tpu.memory_space<vmem>>, vector<1x8x8xf32>
    %34 = vector.shape_cast %33 : vector<1x8x8xf32> to vector<8x8xf32>
    %35 = vector.extract_strided_slice %30 {offsets = [0, 0], sizes = [8, 8], strides = [1, 1]} : vector<8x32xf32> to vector<8x8xf32>
    %36 = vector.extract_strided_slice %30 {offsets = [0, 8], sizes = [8, 8], strides = [1, 1]} : vector<8x32xf32> to vector<8x8xf32>
    %37 = vector.extract_strided_slice %30 {offsets = [0, 16], sizes = [8, 8], strides = [1, 1]} : vector<8x32xf32> to vector<8x8xf32>
    %38 = vector.extract_strided_slice %30 {offsets = [0, 24], sizes = [8, 8], strides = [1, 1]} : vector<8x32xf32> to vector<8x8xf32>
    %39 = vector.shape_cast %35 : vector<8x8xf32> to vector<1x8x8xf32>
    %40 = vector.shape_cast %36 : vector<8x8xf32> to vector<1x8x8xf32>
    %41 = vector.shape_cast %37 : vector<8x8xf32> to vector<1x8x8xf32>
    %42 = vector.shape_cast %38 : vector<8x8xf32> to vector<1x8x8xf32>
    %43 = tpu.concatenate %39, %40, %41, %42 in 0 : vector<1x8x8xf32>, vector<1x8x8xf32>, vector<1x8x8xf32>, vector<1x8x8xf32> -> vector<4x8x8xf32>
    %44 = vector.extract_strided_slice %31 {offsets = [0, 0], sizes = [8, 8], strides = [1, 1]} : vector<8x32xf32> to vector<8x8xf32>
    %45 = vector.extract_strided_slice %31 {offsets = [0, 8], sizes = [8, 8], strides = [1, 1]} : vector<8x32xf32> to vector<8x8xf32>
    %46 = vector.extract_strided_slice %31 {offsets = [0, 16], sizes = [8, 8], strides = [1, 1]} : vector<8x32xf32> to vector<8x8xf32>
    %47 = vector.extract_strided_slice %31 {offsets = [0, 24], sizes = [8, 8], strides = [1, 1]} : vector<8x32xf32> to vector<8x8xf32>
    %48 = vector.shape_cast %44 : vector<8x8xf32> to vector<1x8x8xf32>
    %49 = vector.shape_cast %45 : vector<8x8xf32> to vector<1x8x8xf32>
    %50 = vector.shape_cast %46 : vector<8x8xf32> to vector<1x8x8xf32>
    %51 = vector.shape_cast %47 : vector<8x8xf32> to vector<1x8x8xf32>
    %52 = tpu.concatenate %48, %49, %50, %51 in 0 : vector<1x8x8xf32>, vector<1x8x8xf32>, vector<1x8x8xf32>, vector<1x8x8xf32> -> vector<4x8x8xf32>
    %53 = vector.extract_strided_slice %32 {offsets = [0, 0], sizes = [8, 8], strides = [1, 1]} : vector<8x32xf32> to vector<8x8xf32>
    %54 = vector.extract_strided_slice %32 {offsets = [0, 8], sizes = [8, 8], strides = [1, 1]} : vector<8x32xf32> to vector<8x8xf32>
    %55 = vector.extract_strided_slice %32 {offsets = [0, 16], sizes = [8, 8], strides = [1, 1]} : vector<8x32xf32> to vector<8x8xf32>
    %56 = vector.extract_strided_slice %32 {offsets = [0, 24], sizes = [8, 8], strides = [1, 1]} : vector<8x32xf32> to vector<8x8xf32>
    %57 = vector.shape_cast %53 : vector<8x8xf32> to vector<1x8x8xf32>
    %58 = vector.shape_cast %54 : vector<8x8xf32> to vector<1x8x8xf32>
    %59 = vector.shape_cast %55 : vector<8x8xf32> to vector<1x8x8xf32>
    %60 = vector.shape_cast %56 : vector<8x8xf32> to vector<1x8x8xf32>
    %61 = tpu.concatenate %57, %58, %59, %60 in 0 : vector<1x8x8xf32>, vector<1x8x8xf32>, vector<1x8x8xf32>, vector<1x8x8xf32> -> vector<4x8x8xf32>
    "tpu.trace_start"() <{level = 10 : i32, message = "hqd,hkd->hqk"}> : () -> ()
    %cst_15 = arith.constant dense<0.000000e+00> : vector<4x8x8xf32>
    %62 = tpu.matmul %43, %52, %cst_15 {dimension_numbers = #tpu.dot_dimension_numbers<[2], [2], [1], [1], [0, 0, 0, 1, 1, 1], [0], [0]>} : vector<4x8x8xf32>, vector<4x8x8xf32>, vector<4x8x8xf32> -> vector<4x8x8xf32>
    "tpu.trace_stop"() : () -> ()
    %cst_16 = arith.constant 0.353553385 : f32
    %63 = vector.broadcast %cst_16 : f32 to vector<4x8x8xf32>
    %64 = arith.mulf %62, %63 : vector<4x8x8xf32>
    %cst_17 = arith.constant 0.000000e+00 : f32
    %65 = vector.broadcast %cst_17 : f32 to vector<8x8xf32>
    %66 = arith.cmpf oeq, %34, %65 : vector<8x8xf32>
    %67 = vector.shape_cast %66 : vector<8x8xi1> to vector<1x8x8xi1>
    %cst_18 = arith.constant 0xFF800000 : f32
    %68 = vector.shape_cast %67 : vector<1x8x8xi1> to vector<1x8x8xi1>
    %69 = vector.broadcast %68 : vector<1x8x8xi1> to vector<4x8x8xi1>
    %70 = vector.broadcast %cst_18 : f32 to vector<4x8x8xf32>
    %71 = arith.select %69, %70, %64 : vector<4x8x8xi1>, vector<4x8x8xf32>
    %cst_19 = arith.constant dense<0xFF800000> : vector<4x8xf32>
    %72 = vector.multi_reduction <maximumf>, %71, %cst_19 [2] : vector<4x8x8xf32> to vector<4x8xf32>
    %73 = vector.shape_cast %72 : vector<4x8xf32> to vector<4x8x1xf32>
    %74 = vector.broadcast %73 : vector<4x8x1xf32> to vector<4x8x8xf32>
    %75 = arith.subf %71, %74 : vector<4x8x8xf32>
    %76 = math.exp %75 : vector<4x8x8xf32>
    %cst_20 = arith.constant dense<0.000000e+00> : vector<4x8xf32>
    %77 = vector.multi_reduction <add>, %76, %cst_20 [2] : vector<4x8x8xf32> to vector<4x8xf32>
    %78 = vector.shape_cast %77 : vector<4x8xf32> to vector<4x8x1xf32>
    %79 = tpu.reciprocal %78 : vector<4x8x1xf32> -> vector<4x8x1xf32>
    %80 = vector.broadcast %79 : vector<4x8x1xf32> to vector<4x8x8xf32>
    %81 = arith.mulf %76, %80 : vector<4x8x8xf32>
    "tpu.trace_start"() <{level = 10 : i32, message = "hqk,hkd->hqd"}> : () -> ()
    %cst_21 = arith.constant dense<0.000000e+00> : vector<4x8x8xf32>
    %82 = tpu.matmul %81, %61, %cst_21 {dimension_numbers = #tpu.dot_dimension_numbers<[2], [1], [1], [2], [0, 0, 0, 1, 1, 2], [0], [0]>} : vector<4x8x8xf32>, vector<4x8x8xf32>, vector<4x8x8xf32> -> vector<4x8x8xf32>
    "tpu.trace_stop"() : () -> ()
    %83 = vector.extract_strided_slice %82 {offsets = [0, 0, 0], sizes = [1, 8, 8], strides = [1, 1, 1]} : vector<4x8x8xf32> to vector<1x8x8xf32>
    %84 = vector.shape_cast %83 : vector<1x8x8xf32> to vector<8x8xf32>
    %85 = vector.extract_strided_slice %82 {offsets = [1, 0, 0], sizes = [1, 8, 8], strides = [1, 1, 1]} : vector<4x8x8xf32> to vector<1x8x8xf32>
    %86 = vector.shape_cast %85 : vector<1x8x8xf32> to vector<8x8xf32>
    %87 = vector.extract_strided_slice %82 {offsets = [2, 0, 0], sizes = [1, 8, 8], strides = [1, 1, 1]} : vector<4x8x8xf32> to vector<1x8x8xf32>
    %88 = vector.shape_cast %87 : vector<1x8x8xf32> to vector<8x8xf32>
    %89 = vector.extract_strided_slice %82 {offsets = [3, 0, 0], sizes = [1, 8, 8], strides = [1, 1, 1]} : vector<4x8x8xf32> to vector<1x8x8xf32>
    %90 = vector.shape_cast %89 : vector<1x8x8xf32> to vector<8x8xf32>
    %91 = tpu.concatenate %84, %86, %88, %90 in 1 : vector<8x8xf32>, vector<8x8xf32>, vector<8x8xf32>, vector<8x8xf32> -> vector<8x32xf32>
    %c0_22 = arith.constant 0 : index
    %c0_23 = arith.constant 0 : index
    %92 = vector.load %arg6[%c0_22, %c0_23] : memref<32x32xf32, #tpu.memory_space<vmem>>, vector<32x32xf32>
    %cst_24 = arith.constant dense<0.000000e+00> : vector<8x32xf32>
    %93 = tpu.matmul %91, %92, %cst_24 {dimension_numbers = #tpu.dot_dimension_numbers<[1], [0], [0], [1], [0, 0, 1, 1], [], []>} : vector<8x32xf32>, vector<32x32xf32>, vector<8x32xf32> -> vector<8x32xf32>
    %c0_25 = arith.constant 0 : index
    %c0_26 = arith.constant 0 : index
    %94 = vector.load %arg7[%c0_25, %c0_26] : memref<1x32xf32, #tpu.memory_space<vmem>>, vector<1x32xf32>
    %95 = vector.broadcast %94 : vector<1x32xf32> to vector<8x32xf32>
    %96 = arith.addf %93, %95 : vector<8x32xf32>
    %97 = arith.addf %96, %1 : vector<8x32xf32>
    %c0_27 = arith.constant 0 : index
    %c0_28 = arith.constant 0 : index
    %c0_29 = arith.constant 0 : index
    %98 = vector.load %arg8[%c0_27, %c0_28, %c0_29] : memref<1x8x32xf32, #tpu.memory_space<vmem>>, vector<1x8x32xf32>
    %99 = vector.shape_cast %98 : vector<1x8x32xf32> to vector<8x32xf32>
    %100 = vector.shape_cast %97 : vector<8x32xf32> to vector<1x8x32xf32>
    tpu.vector_store %arg8[%c0_27, %c0_28, %c0_29], %100 {strides = array<i32>} : memref<1x8x32xf32, #tpu.memory_space<vmem>>, vector<1x8x32xf32>,
    return
  }
  func.func @transform_0(%arg0: i32) -> i32 {
    %c0_i32 = arith.constant 0 : i32
    %c0_i32_0 = arith.constant 0 : i32
    return %c0_i32 : i32
  }
  func.func @transform_1(%arg0: i32) -> (i32, i32, i32) {
    %c0_i32 = arith.constant 0 : i32
    %c0_i32_0 = arith.constant 0 : i32
    %c0_i32_1 = arith.constant 0 : i32
    return %arg0, %c0_i32, %c0_i32_0 : i32, i32, i32
  }
  func.func @transform_2(%arg0: i32) -> (i32, i32, i32) {
    %c0_i32 = arith.constant 0 : i32
    %c0_i32_0 = arith.constant 0 : i32
    %c0_i32_1 = arith.constant 0 : i32
    return %arg0, %c0_i32, %c0_i32_0 : i32, i32, i32
  }
  func.func @transform_3(%arg0: i32) -> (i32, i32) {
    %c0_i32 = arith.constant 0 : i32
    %c0_i32_0 = arith.constant 0 : i32
    %c0_i32_1 = arith.constant 0 : i32
    return %c0_i32, %c0_i32_0 : i32, i32
  }
  func.func @transform_4(%arg0: i32) -> (i32, i32) {
    %c0_i32 = arith.constant 0 : i32
    %c0_i32_0 = arith.constant 0 : i32
    %c0_i32_1 = arith.constant 0 : i32
    return %c0_i32, %c0_i32_0 : i32, i32
  }
  func.func @transform_5(%arg0: i32) -> (i32, i32) {
    %c0_i32 = arith.constant 0 : i32
    %c0_i32_0 = arith.constant 0 : i32
    %c0_i32_1 = arith.constant 0 : i32
    return %c0_i32, %c0_i32_0 : i32, i32
  }
  func.func @transform_6(%arg0: i32) -> (i32, i32) {
    %c0_i32 = arith.constant 0 : i32
    %c0_i32_0 = arith.constant 0 : i32
    %c0_i32_1 = arith.constant 0 : i32
    return %c0_i32, %c0_i32_0 : i32, i32
  }
  func.func @transform_7(%arg0: i32) -> (i32, i32, i32) {
    %c0_i32 = arith.constant 0 : i32
    %c0_i32_0 = arith.constant 0 : i32
    %c0_i32_1 = arith.constant 0 : i32
    return %arg0, %c0_i32, %c0_i32_0 : i32, i32, i32
  }
}

</mosaic_0001>

<llo_original>
// kernel: tpu_custom_call.1
$region0: #{tpu_custom_call.1}
  #allocation0 [shape = 'u32[]', space=smem, size = 0x4, offset = 0x4, fixed_abs, tag = 'smem constant byte address 0x4 - core index']
  #allocation1 [shape = 'u32[144,128]{1,0:T(1,128)}', space=vmem, size = 0x12000, scoped, tag = 'internal scratch']
  %s0 = inlined_call_operand.hbm [shape: f32[2], index: 0, kind: input, shape index: {}]
  %s1 = inlined_call_operand.hbm [shape: f32[2,8,32], index: 1, kind: input, shape index: {}]
  %s2 = inlined_call_operand.hbm [shape: f32[2,8,8], index: 2, kind: input, shape index: {}]
  %s3 = inlined_call_operand.hbm [shape: f32[32,96], index: 3, kind: input, shape index: {}]
  %s4 = inlined_call_operand.vmem [shape: f32[1,96], index: 4, kind: input, shape index: {}]
  %s5 = inlined_call_operand.hbm [shape: f32[32,32], index: 5, kind: input, shape index: {}]
  %s6 = inlined_call_operand.vmem [shape: f32[1,32], index: 6, kind: input, shape index: {}]
  %s7 = inlined_call_operand.hbm [shape: f32[2,8,32], index: 7, kind: output, shape index: {}]
  %s8 = sld [smem:[#allocation0]]
  $region81: #{tpu_custom_call.1} parent=0
    _
  %s10 = ssub.s32 1, %s8
  %s11 = scalar_select 0, %s10, %s8
  $region1: #{tpu_custom_call.1} parent=0
    #allocation2 [shape = 'u8[512]{0}', space=smem, size = 0x200, scoped, tag = 'input window, operand 0, single buffered']
    #allocation3 [shape = 's32[2]{0}', space=sflag, size = 0x8, scoped, tag = 'scoped memory for tpu_custom_call.1']
    #allocation4 [shape = 's32[2]{0}', space=sflag, size = 0x8, scoped, tag = 'scoped memory for tpu_custom_call.1']
    #allocation5 [shape = 's32[2]{0}', space=sflag, size = 0x8, scoped, tag = 'scoped memory for tpu_custom_call.1']
    #allocation6 [shape = 'u8[8192]{0}', space=vmem, size = 0x2000, scoped, tag = 'input window, operand 1']
    #allocation7 [shape = 'u8[8192]{0}', space=vmem, size = 0x2000, scoped, tag = 'input window, operand 2']
    #allocation8 [shape = 's32[2]{0}', space=sflag, size = 0x8, scoped, tag = 'scoped memory for tpu_custom_call.1']
    #allocation9 [shape = 'u8[16384]{0}', space=vmem, size = 0x4000, scoped, tag = 'input window, operand 3, single buffered']
    #allocation10 [shape = 'u8[16384]{0}', space=vmem, size = 0x4000, scoped, tag = 'input window, operand 5, single buffered']
    #allocation11 [shape = 's32[1]{0}', space=sflag, size = 0x4, scoped, tag = 'scoped memory for tpu_custom_call.1']
    #allocation12 [shape = 'u8[8192]{0}', space=vmem, size = 0x2000, scoped, tag = 'output window, operand 0']
    %12 = vsyncpa [#allocation5], 0
    %13 = vsyncpa [#allocation3], 0
    %s14 = scalar_lea.sflag [#allocation3], 1
    %15 = vsyncpa %s14, 0
    %16 = vsyncpa [#allocation8], 0
    %s17 = scalar_lea.sflag [#allocation8], 1
    %18 = vsyncpa %s17, 0
    %19 = vsyncpa [#allocation11], 0
    %20 = vsyncpa [#allocation4], 0
    %s21 = scalar_lea.sflag [#allocation4], 1
    %22 = vsyncpa %s21, 0
    loop: start=0, step=1, limit=4
    $region2: #{tpu_custom_call.1} parent=1 // loop_pre_header
      _
    $region3: #{tpu_custom_call.1} parent=1 // loop_header
      %s24 = sphi 0, %s28
      %p25 = scmp.ge.s32.totalorder %s24, 4
      %s32 = sphi 0, %s32
      %s34 = sphi 0, %s32
      %s35 = sphi 0, %s34
      %s49 = sphi 0, %s35
      %s55 = sphi 0, %s57
      %s58 = sphi 0, %s55
      %s59 = sphi 0, %s58
      %s75 = sphi 0, %s59
      %s81 = sphi 0, %s83
      %s84 = sphi 0, %s81
      %s85 = sphi 0, %s84
      %s101 = sphi 0, %s85
      %s105 = sphi 0, %s105
      %s107 = sphi 0, %s105
      %s108 = sphi 0, %s107
      %s122 = sphi 0, %s108
      %s126 = sphi 0, %s126
      %s128 = sphi 0, %s126
      %s129 = sphi 0, %s128
      %s143 = sphi 0, %s129
      %s147 = sphi 0, %s147
      %s149 = sphi 0, %s147
      %s150 = sphi 0, %s149
      %s164 = sphi 0, %s150
      %s168 = sphi 0, %s168
      %s170 = sphi 0, %s168
      %s171 = sphi 0, %s170
      %s185 = sphi 0, %s171
      %s191 = sphi 0, %s193
      %s194 = sphi 0, %s191
      %s195 = sphi 0, %s194
      %s211 = sphi 0, %s195
    $region4: #{tpu_custom_call.1} parent=1 // loop_header_branch
      %27 = sbr.rel (%p25) target = $region8
    $region5: #{tpu_custom_call.1} parent=1 // loop_body
      %s29 = ssub.s32 %s24, 1
      %s30 = ssub.s32 %s24, 2
      %s31 = sadd.s32 %s24, 1
      %s33 = sadd.s32 %s32, 1
      %p36 = scmp.eq.s32.totalorder %s24, 1
      %p37 = scmp.ne.s32.totalorder %s32, %s34
      %p38 = scmp.eq.s32.totalorder %s24, 0
      %p39 = por %p37, %p38
      %p40 = scmp.ne.s32.totalorder %s32, %s34
      %p41 = scmp.eq.s32.totalorder %s29, 1
      %p42 = por %p40, %p41
      %p43 = scmp.ne.s32.totalorder %s34, %s35
      %p44 = scmp.eq.s32.totalorder %s29, 0
      %p45 = por %p43, %p44
      %p46 = scmp.ne.s32.totalorder %s34, %s35
      %p47 = scmp.eq.s32.totalorder %s30, 1
      %p48 = por %p46, %p47
      %p50 = scmp.ne.s32.totalorder %s35, %s49
      %p51 = scmp.eq.s32.totalorder %s30, 0
      %p52 = por %p50, %p51
      %s53 = ssub.s32 %s24, %s31
      %p54 = scmp.eq.s32.totalorder %s53, 0
      %s56 = sadd.s32 %s55, 1
      %s57 = scalar_select %p54, %s55, %s56
      %p60 = pneg %p54
      %p61 = scmp.eq.s32.totalorder %s24, 1
      %p62 = por %p60, %p61
      %p63 = scmp.ne.s32.totalorder %s55, %s58
      %p64 = scmp.eq.s32.totalorder %s24, 0
      %p65 = por %p63, %p64
      %p66 = scmp.ne.s32.totalorder %s55, %s58
      %p67 = scmp.eq.s32.totalorder %s29, 1
      %p68 = por %p66, %p67
      %p69 = scmp.ne.s32.totalorder %s58, %s59
      %p70 = scmp.eq.s32.totalorder %s29, 0
      %p71 = por %p69, %p70
      %p72 = scmp.ne.s32.totalorder %s58, %s59
      %p73 = scmp.eq.s32.totalorder %s30, 1
      %p74 = por %p72, %p73
      %p76 = scmp.ne.s32.totalorder %s59, %s75
      %p77 = scmp.eq.s32.totalorder %s30, 0
      %p78 = por %p76, %p77
      %s79 = ssub.s32 %s24, %s31
      %p80 = scmp.eq.s32.totalorder %s79, 0
      %s82 = sadd.s32 %s81, 1
      %s83 = scalar_select %p80, %s81, %s82
      %p86 = pneg %p80
      %p87 = scmp.eq.s32.totalorder %s24, 1
      %p88 = por %p86, %p87
      %p89 = scmp.ne.s32.totalorder %s81, %s84
      %p90 = scmp.eq.s32.totalorder %s24, 0
      %p91 = por %p89, %p90
      %p92 = scmp.ne.s32.totalorder %s81, %s84
      %p93 = scmp.eq.s32.totalorder %s29, 1
      %p94 = por %p92, %p93
      %p95 = scmp.ne.s32.totalorder %s84, %s85
      %p96 = scmp.eq.s32.totalorder %s29, 0
      %p97 = por %p95, %p96
      %p98 = scmp.ne.s32.totalorder %s84, %s85
      %p99 = scmp.eq.s32.totalorder %s30, 1
      %p100 = por %p98, %p99
      %p102 = scmp.ne.s32.totalorder %s85, %s101
      %p103 = scmp.eq.s32.totalorder %s30, 0
      %p104 = por %p102, %p103
      %s106 = sadd.s32 %s105, 1
      %p109 = scmp.eq.s32.totalorder %s24, 1
      %p110 = scmp.ne.s32.totalorder %s105, %s107
      %p111 = scmp.eq.s32.totalorder %s24, 0
      %p112 = por %p110, %p111
      %p113 = scmp.ne.s32.totalorder %s105, %s107
      %p114 = scmp.eq.s32.totalorder %s29, 1
      %p115 = por %p113, %p114
      %p116 = scmp.ne.s32.totalorder %s107, %s108
      %p117 = scmp.eq.s32.totalorder %s29, 0
      %p118 = por %p116, %p117
      %p119 = scmp.ne.s32.totalorder %s107, %s108
      %p120 = scmp.eq.s32.totalorder %s30, 1
      %p121 = por %p119, %p120
      %p123 = scmp.ne.s32.totalorder %s108, %s122
      %p124 = scmp.eq.s32.totalorder %s30, 0
      %p125 = por %p123, %p124
      %s127 = sadd.s32 %s126, 1
      %p130 = scmp.eq.s32.totalorder %s24, 1
      %p131 = scmp.ne.s32.totalorder %s126, %s128
      %p132 = scmp.eq.s32.totalorder %s24, 0
      %p133 = por %p131, %p132
      %p134 = scmp.ne.s32.totalorder %s126, %s128
      %p135 = scmp.eq.s32.totalorder %s29, 1
      %p136 = por %p134, %p135
      %p137 = scmp.ne.s32.totalorder %s128, %s129
      %p138 = scmp.eq.s32.totalorder %s29, 0
      %p139 = por %p137, %p138
      %p140 = scmp.ne.s32.totalorder %s128, %s129
      %p141 = scmp.eq.s32.totalorder %s30, 1
      %p142 = por %p140, %p141
      %p144 = scmp.ne.s32.totalorder %s129, %s143
      %p145 = scmp.eq.s32.totalorder %s30, 0
      %p146 = por %p144, %p145
      %s148 = sadd.s32 %s147, 1
      %p151 = scmp.eq.s32.totalorder %s24, 1
      %p152 = scmp.ne.s32.totalorder %s147, %s149
      %p153 = scmp.eq.s32.totalorder %s24, 0
      %p154 = por %p152, %p153
      %p155 = scmp.ne.s32.totalorder %s147, %s149
      %p156 = scmp.eq.s32.totalorder %s29, 1
      %p157 = por %p155, %p156
      %p158 = scmp.ne.s32.totalorder %s149, %s150
      %p159 = scmp.eq.s32.totalorder %s29, 0
      %p160 = por %p158, %p159
      %p161 = scmp.ne.s32.totalorder %s149, %s150
      %p162 = scmp.eq.s32.totalorder %s30, 1
      %p163 = por %p161, %p162
      %p165 = scmp.ne.s32.totalorder %s150, %s164
      %p166 = scmp.eq.s32.totalorder %s30, 0
      %p167 = por %p165, %p166
      %s169 = sadd.s32 %s168, 1
      %p172 = scmp.eq.s32.totalorder %s24, 1
      %p173 = scmp.ne.s32.totalorder %s168, %s170
      %p174 = scmp.eq.s32.totalorder %s24, 0
      %p175 = por %p173, %p174
      %p176 = scmp.ne.s32.totalorder %s168, %s170
      %p177 = scmp.eq.s32.totalorder %s29, 1
      %p178 = por %p176, %p177
      %p179 = scmp.ne.s32.totalorder %s170, %s171
      %p180 = scmp.eq.s32.totalorder %s29, 0
      %p181 = por %p179, %p180
      %p182 = scmp.ne.s32.totalorder %s170, %s171
      %p183 = scmp.eq.s32.totalorder %s30, 1
      %p184 = por %p182, %p183
      %p186 = scmp.ne.s32.totalorder %s171, %s185
      %p187 = scmp.eq.s32.totalorder %s30, 0
      %p188 = por %p186, %p187
      %s189 = ssub.s32 %s24, %s31
      %p190 = scmp.eq.s32.totalorder %s189, 0
      %s192 = sadd.s32 %s191, 1
      %s193 = scalar_select %p190, %s191, %s192
      %p196 = pneg %p190
      %p197 = scmp.eq.s32.totalorder %s24, 1
      %p198 = por %p196, %p197
      %p199 = scmp.ne.s32.totalorder %s191, %s194
      %p200 = scmp.eq.s32.totalorder %s24, 0
      %p201 = por %p199, %p200
      %p202 = scmp.ne.s32.totalorder %s191, %s194
      %p203 = scmp.eq.s32.totalorder %s29, 1
      %p204 = por %p202, %p203
      %p205 = scmp.ne.s32.totalorder %s194, %s195
      %p206 = scmp.eq.s32.totalorder %s29, 0
      %p207 = por %p205, %p206
      %p208 = scmp.ne.s32.totalorder %s194, %s195
      %p209 = scmp.eq.s32.totalorder %s30, 1
      %p210 = por %p208, %p209
      %p212 = scmp.ne.s32.totalorder %s195, %s211
      %p213 = scmp.eq.s32.totalorder %s30, 0
      %p214 = por %p212, %p213
      %p215 = scmp.le.s32.totalorder 1, %s24
      %p216 = scmp.lt.s32.totalorder %s24, 3
      %p217 = pnand %p215, %p216
      %p218 = pneg %p217
      // Predicated region
      $region9: #{tpu_custom_call.1} parent=5 // pred_check
        _
      $region10: #{tpu_custom_call.1} parent=5 // pred_check_branch
        %220 = sbr.rel (%p217) target = $region12
      $region11: #{tpu_custom_call.1} parent=5 // pred_region
        %s221 = ssub.s32 %s24, 1
        // Predicated region
        $region13: #{tpu_custom_call.1} parent=11 // pred_check
          %p222 = pneg %p45
        $region14: #{tpu_custom_call.1} parent=11 // pred_check_branch
          %224 = sbr.rel (%p222) target = $region16
        $region15: #{tpu_custom_call.1} parent=11 // pred_region
          %s226 = ssub.s32 16, 16
          %227 = vsyncadd [#allocation5], %s226
          %230 = dma.hbm_to_smem %s0, 16, [#allocation2], [#allocation5]
        $region16: #{tpu_custom_call.1} parent=11 // pred_fallthru
          _
        // Predicated region
        $region17: #{tpu_custom_call.1} parent=11 // pred_check
          %p231 = pneg %p118
        $region18: #{tpu_custom_call.1} parent=11 // pred_check_branch
          %233 = sbr.rel (%p231) target = $region20
        $region19: #{tpu_custom_call.1} parent=11 // pred_region
          %s235 = ssub.s32 512, 512
          %236 = vsyncadd [#allocation8], %s235
          %s237 = sshll.u32 [#allocation9], 4
          %s238 = int_to_ptr.vmem [resolvable:$true] %s237
          %243 = dma.hbm_to_vmem [thread:$0]  %s3, 512, %s238, [#allocation8], 128, 128, 8
        $region20: #{tpu_custom_call.1} parent=11 // pred_fallthru
          _
        // Predicated region
        $region21: #{tpu_custom_call.1} parent=11 // pred_check
          %p244 = pneg %p139
        $region22: #{tpu_custom_call.1} parent=11 // pred_check_branch
          %246 = sbr.rel (%p244) target = $region24
        $region23: #{tpu_custom_call.1} parent=11 // pred_region
          _
        $region24: #{tpu_custom_call.1} parent=11 // pred_fallthru
          _
        // Predicated region
        $region25: #{tpu_custom_call.1} parent=11 // pred_check
          %p247 = pneg %p160
        $region26: #{tpu_custom_call.1} parent=11 // pred_check_branch
          %249 = sbr.rel (%p247) target = $region28
        $region27: #{tpu_custom_call.1} parent=11 // pred_region
          %s251 = ssub.s32 512, 512
          %252 = vsyncadd [#allocation11], %s251
          %s253 = sshll.u32 [#allocation10], 4
          %s254 = int_to_ptr.vmem [resolvable:$true] %s253
          %259 = dma.hbm_to_vmem [thread:$0]  %s5, 512, %s254, [#allocation11], 128, 128, 8
        $region28: #{tpu_custom_call.1} parent=11 // pred_fallthru
          _
        // Predicated region
        $region29: #{tpu_custom_call.1} parent=11 // pred_check
          %p260 = pneg %p181
        $region30: #{tpu_custom_call.1} parent=11 // pred_check_branch
          %262 = sbr.rel (%p260) target = $region32
        $region31: #{tpu_custom_call.1} parent=11 // pred_region
          _
        $region32: #{tpu_custom_call.1} parent=11 // pred_fallthru
          _
      $region12: #{tpu_custom_call.1} parent=5 // pred_fallthru
        _
      %p263 = scmp.lt.s32.totalorder %s24, 2
      // Predicated region
      $region33: #{tpu_custom_call.1} parent=5 // pred_check
        %p264 = pneg %p263
      $region34: #{tpu_custom_call.1} parent=5 // pred_check_branch
        %266 = sbr.rel (%p264) target = $region36
      $region35: #{tpu_custom_call.1} parent=5 // pred_region
        // Predicated region
        $region37: #{tpu_custom_call.1} parent=35 // pred_check
          %p267 = pneg %p65
        $region38: #{tpu_custom_call.1} parent=35 // pred_check_branch
          %269 = sbr.rel (%p267) target = $region40
        $region39: #{tpu_custom_call.1} parent=35 // pred_region
          %s270 = sand.u32 %s55, 1
          %s271 = scalar_lea.sflag [#allocation3], %s270
          %s272 = sand.u32 %s55, 1
          %s273 = smul.addr %s272, 8
          %s274 = scalar_lea.vmem [#allocation6], %s273
          %s276 = ssub.s32 128, 128
          %277 = vsyncadd %s271, %s276
          %s278 = smul.addr %s24, 128
          %s279 = scalar_lea.hbm %s1, %s278
          %s281 = sshll.u32 %s274, 4
          %s282 = int_to_ptr.vmem [resolvable:$true] %s281
          %284 = dma.hbm_to_vmem [thread:$0]  %s279, 128, %s282, %s271
        $region40: #{tpu_custom_call.1} parent=35 // pred_fallthru
          _
        // Predicated region
        $region41: #{tpu_custom_call.1} parent=35 // pred_check
          %p285 = pneg %p91
        $region42: #{tpu_custom_call.1} parent=35 // pred_check_branch
          %287 = sbr.rel (%p285) target = $region44
        $region43: #{tpu_custom_call.1} parent=35 // pred_region
          %s288 = sand.u32 %s24, 1
          %s289 = scalar_lea.sflag [#allocation8], %s288
          %s290 = sand.u32 %s81, 1
          %s291 = smul.addr %s290, 8
          %s292 = scalar_lea.vmem [#allocation7], %s291
          %s294 = ssub.s32 128, 128
          %295 = vsyncadd %s289, %s294
          %s296 = smul.addr %s24, 128
          %s297 = scalar_lea.hbm %s2, %s296
          %s299 = sshll.u32 %s292, 4
          %s300 = int_to_ptr.vmem [resolvable:$true] %s299
          %302 = dma.hbm_to_vmem [thread:$0]  %s297, 128, %s300, %s289
        $region44: #{tpu_custom_call.1} parent=35 // pred_fallthru
          _
      $region36: #{tpu_custom_call.1} parent=5 // pred_fallthru
        _
      %p303 = scmp.le.s32.totalorder 1, %s24
      %p304 = scmp.lt.s32.totalorder %s24, 3
      %p305 = pnand %p303, %p304
      %p306 = pneg %p305
      // Predicated region
      $region45: #{tpu_custom_call.1} parent=5 // pred_check
        _
      $region46: #{tpu_custom_call.1} parent=5 // pred_check_branch
        %308 = sbr.rel (%p305) target = $region48
      $region47: #{tpu_custom_call.1} parent=5 // pred_region
        %s309 = ssub.s32 %s24, 1
        // Predicated region
        $region49: #{tpu_custom_call.1} parent=47 // pred_check
          %p310 = pneg %p45
        $region50: #{tpu_custom_call.1} parent=47 // pred_check_branch
          %312 = sbr.rel (%p310) target = $region52
        $region51: #{tpu_custom_call.1} parent=47 // pred_region
          %313 = dma.done [#allocation5], 16
        $region52: #{tpu_custom_call.1} parent=47 // pred_fallthru
          _
        %s314 = sand.u32 %s58, 1
        %s315 = scalar_lea.sflag [#allocation3], %s314
        %s316 = sand.u32 %s58, 1
        %s317 = smul.addr %s316, 8
        %s318 = scalar_lea.vmem [#allocation6], %s317
        // Predicated region
        $region53: #{tpu_custom_call.1} parent=47 // pred_check
          %p319 = pneg %p71
        $region54: #{tpu_custom_call.1} parent=47 // pred_check_branch
          %321 = sbr.rel (%p319) target = $region56
        $region55: #{tpu_custom_call.1} parent=47 // pred_region
          %322 = dma.done %s315, 128
        $region56: #{tpu_custom_call.1} parent=47 // pred_fallthru
          _
        %s323 = sand.u32 %s29, 1
        %s324 = scalar_lea.sflag [#allocation8], %s323
        %s325 = sand.u32 %s84, 1
        %s326 = smul.addr %s325, 8
        %s327 = scalar_lea.vmem [#allocation7], %s326
        // Predicated region
        $region57: #{tpu_custom_call.1} parent=47 // pred_check
          %p328 = pneg %p97
        $region58: #{tpu_custom_call.1} parent=47 // pred_check_branch
          %330 = sbr.rel (%p328) target = $region60
        $region59: #{tpu_custom_call.1} parent=47 // pred_region
          %331 = dma.done %s324, 128
        $region60: #{tpu_custom_call.1} parent=47 // pred_fallthru
          _
        // Predicated region
        $region61: #{tpu_custom_call.1} parent=47 // pred_check
          %p332 = pneg %p118
        $region62: #{tpu_custom_call.1} parent=47 // pred_check_branch
          %334 = sbr.rel (%p332) target = $region64
        $region63: #{tpu_custom_call.1} parent=47 // pred_region
          %335 = dma.done [#allocation8], 512
        $region64: #{tpu_custom_call.1} parent=47 // pred_fallthru
          _
        // Predicated region
        $region65: #{tpu_custom_call.1} parent=47 // pred_check
          %p336 = pneg %p160
        $region66: #{tpu_custom_call.1} parent=47 // pred_check_branch
          %338 = sbr.rel (%p336) target = $region68
        $region67: #{tpu_custom_call.1} parent=47 // pred_region
          %339 = dma.done [#allocation11], 512
        $region68: #{tpu_custom_call.1} parent=47 // pred_fallthru
          _
        %340 = sfence
        %p341 = pneg %p45
        %p342 = pneg %p42
        %s343 = sand.u32 %s58, 1
        %s344 = scalar_lea.sflag [#allocation3], %s343
        %s345 = sand.u32 %s58, 1
        %s346 = smul.addr %s345, 8
        %s347 = scalar_lea.vmem [#allocation6], %s346
        %p348 = pneg %p71
        %p349 = pneg %p68
        %s350 = sand.u32 %s29, 1
        %s351 = scalar_lea.sflag [#allocation8], %s350
        %s352 = sand.u32 %s84, 1
        %s353 = smul.addr %s352, 8
        %s354 = scalar_lea.vmem [#allocation7], %s353
        %p355 = pneg %p97
        %p356 = pneg %p94
        %p357 = pneg %p118
        %p358 = pneg %p115
        %p359 = pneg %p139
        %p360 = pneg %p136
        %p361 = pneg %p160
        %p362 = pneg %p157
        %p363 = pneg %p181
        %p364 = pneg %p178
        %p365 = pneg %p207
        %p366 = pneg %p204
        %s367 = sand.u32 %s194, 1
        %s368 = scalar_lea.sflag [#allocation4], %s367
        %s369 = sand.u32 %s194, 1
        %s370 = smul.addr %s369, 8
        %s371 = scalar_lea.vmem [#allocation12], %s370
        %v372 = vld [vmem:[%s318] sm:$0xff]
        %s373 = sld [smem:[#allocation2]]
        %s374 = sld [smem:[#allocation2 + $0x1]]
        %vm375 = vcmask 261120
        %v376 = vsel %vm375, %v372, 0.0
        %377 = vadd.xlane.f32.xlu0 %v376
        %v378 = vpop.xlane.xlu0 %377
        %v379 = vrcp.pop 32.0
        %v380 = vmul.f32 %v378, %v379
        %v381 = vsub.f32 %v372, %v380
        %v382 = vmul.f32 %v381, %v381
        %v383 = vsel %vm375, %v382, 0.0
        %384 = vadd.xlane.f32.xlu0 %v383
        %v385 = vpop.xlane.xlu0 %384
        %v386 = vrcp.pop 31.0
        %v387 = vmul.f32 %v385, %v386
        %v388 = vrsqrt.pop %v387
        %v389 = vmul.f32 %v387, %v388
        %vm390 = vcmp.eq.f32.partialorder %v387, inf
        %v391 = vsel %vm390, %v387, %v389
        %vm392 = vcmp.eq.f32.partialorder %v387, 0.0
        %v393 = vand.u32 %v387, 2147483648
        %v394 = vsel %vm392, %v393, %v391
        %v395 = vadd.f32 %v394, 1e-06
        %v396 = vrcp.pop %v395
        %v397 = vstv %s373
        %v398 = vmul.f32 %v397, %v381
        %v399 = vmul.f32 %v398, %v396
        %v400 = vstv %s374
        %v401 = vadd.f32 %v399, %v400
        %v402 = vld [vmem:[#allocation9] sm:$0xff]
        %v403 = vld [vmem:[#allocation9 + $0x8] sm:$0xff]
        %v404 = vld [vmem:[#allocation9 + $0x10] sm:$0xff]
        %v405 = vld [vmem:[#allocation9 + $0x18] sm:$0xff]
        %v406 = vld [vmem:[%s4] sm:$0x1]
        %v408 = vlaneseq
        %v409 = vshrl.u32 %v408, 7
        %v410 = vsub.s32 0, %v409
        %v411 = vrot.slane %v406, %v410
        %v414 = vsel %vm375, %v401, 0
        %416 = vmatprep.subr.mxu0 0.0
        %417 = vmatpush1.msra.mxu0 %v402
        %418 = vmatprep.subr.mxu0 0.0
        %419 = vmatpush1.msra.mxu0 %v403
        %420 = vmatprep.subr.mxu0 0.0
        %421 = vmatpush1.msra.mxu0 %v404
        %422 = vmatprep.subr.mxu0 0.0
        %423 = vmatpush1.msra.mxu0 %v405
        %424 = vmatprep.subr.mxu0 0.0
        %425 = vmatpush1.msra.mxu0 0.0
        %426 = vmatprep.subr.mxu0 0.0
        %427 = vmatpush1.msra.mxu0 0.0
        %428 = vmatprep.subr.mxu0 0.0
        %429 = vmatpush1.msra.mxu0 0.0
        %430 = vmatprep.subr.mxu0 0.0
        %431 = vmatpush1.msra.mxu0 0.0
        %432 = vmatprep.subr.mxu0 0.0
        %433 = vmatpush1.msra.mxu0 0.0
        %434 = vmatprep.subr.mxu0 0.0
        %435 = vmatpush1.msra.mxu0 0.0
        %436 = vmatprep.subr.mxu0 0.0
        %437 = vmatpush1.msra.mxu0 0.0
        %438 = vmatprep.subr.mxu0 0.0
        %439 = vmatpush1.msra.mxu0 0.0
        %440 = vmatprep.subr.mxu0 0.0
        %441 = vmatpush1.msra.mxu0 0.0
        %442 = vmatprep.subr.mxu0 0.0
        %443 = vmatpush1.msra.mxu0 0.0
        %444 = vmatprep.subr.mxu0 0.0
        %445 = vmatpush1.msra.mxu0 0.0
        %446 = vmatprep.subr.mxu0 0.0
        %447 = vmatpush1.msra.mxu0 0.0
        %448 = vmatprep.subr.mxu0 0.0
        %449 = vmatpush1.msra.mxu0 0.0
        %450 = vmatprep.subr.mxu0 0.0
        %451 = vmatpush1.msra.mxu0 0.0
        %452 = vmatprep.subr.mxu0 0.0
        %453 = vmatpush1.msra.mxu0 0.0
        %454 = vmatprep.subr.mxu0 0.0
        %455 = vmatpush1.msra.mxu0 0.0
        %456 = vmatprep.subr.mxu0 0.0
        %457 = vmatpush1.msra.mxu0 0.0
        %458 = vmatprep.subr.mxu0 0.0
        %459 = vmatpush1.msra.mxu0 0.0
        %460 = vmatprep.subr.mxu0 0.0
        %461 = vmatpush1.msra.mxu0 0.0
        %462 = vmatprep.subr.mxu0 0.0
        %463 = vmatpush1.msra.mxu0 0.0
        %464 = vmatprep.subr.mxu0 0.0
        %465 = vmatpush1.msra.mxu0 0.0
        %466 = vmatprep.subr.mxu0 0.0
        %467 = vmatpush1.msra.mxu0 0.0
        %468 = vmatprep.subr.mxu0 0.0
        %469 = vmatpush1.msra.mxu0 0.0
        %470 = vmatprep.subr.mxu0 0.0
        %471 = vmatpush1.msra.mxu0 0.0
        %472 = vmatprep.subr.mxu0 0.0
        %473 = vmatpush1.msra.mxu0 0.0
        %474 = vmatprep.subr.mxu0 0.0
        %475 = vmatpush1.msra.mxu0 0.0
        %476 = vmatprep.subr.mxu0 0.0
        %477 = vmatpush1.msra.mxu0 0.0
        %478 = vmatprep.subr.mxu0 0.0
        %479 = vmatpush1.msra.mxu0 0.0
        %480 = vmatprep.mubr.f32.mxu0 0.0
        %481 = vmatmul.mubr.f32.gmra.mrb[0].mxu0 %v414
        %v482 = vpop.f32.mrb[0].mxu0
        %v483 = vadd.f32 %v411, %v482
        %v484 = vpop.f32.mrb[0].mxu0
        %485 = vdwg.mxu0
        %v486 = vld [vmem:[%s327] sm:$0xff]
        %488 = vrot.lane.b32.xlu0 %v483, 120
        %v489 = vpop.permute.xlu0 %488
        %490 = vrot.lane.b32.xlu0 %v483, 112
        %v491 = vpop.permute.xlu0 %490
        %492 = vrot.lane.b32.xlu0 %v483, 104
        %v493 = vpop.permute.xlu0 %492
        %494 = vrot.lane.b32.xlu0 %v483, 96
        %v495 = vpop.permute.xlu0 %494
        %vm496 = vcmask 64512
        %v497 = vsel %vm496, %v483, 0
        %v499 = vsel %vm496, %v495, 0
        %501 = vmatprep.subr.mxu0 0.0
        %502 = vmatpush1.xpose.msra.mxu0 %v499
        %503 = vmatprep.subr.mxu0 0.0
        %504 = vmatpush1.xpose.msra.mxu0 0.0
        %505 = vmatprep.subr.mxu0 0.0
        %506 = vmatpush1.xpose.msra.mxu0 0.0
        %507 = vmatprep.subr.mxu0 0.0
        %508 = vmatpush1.xpose.msra.mxu0 0.0
        %509 = vmatprep.subr.mxu0 0.0
        %510 = vmatpush1.xpose.msra.mxu0 0.0
        %511 = vmatprep.subr.mxu0 0.0
        %512 = vmatpush1.xpose.msra.mxu0 0.0
        %513 = vmatprep.subr.mxu0 0.0
        %514 = vmatpush1.xpose.msra.mxu0 0.0
        %515 = vmatprep.subr.mxu0 0.0
        %516 = vmatpush1.xpose.msra.mxu0 0.0
        %517 = vmatprep.subr.mxu0 0.0
        %518 = vmatpush1.xpose.msra.mxu0 0.0
        %519 = vmatprep.subr.mxu0 0.0
        %520 = vmatpush1.xpose.msra.mxu0 0.0
        %521 = vmatprep.subr.mxu0 0.0
        %522 = vmatpush1.xpose.msra.mxu0 0.0
        %523 = vmatprep.subr.mxu0 0.0
        %524 = vmatpush1.xpose.msra.mxu0 0.0
        %525 = vmatprep.subr.mxu0 0.0
        %526 = vmatpush1.xpose.msra.mxu0 0.0
        %527 = vmatprep.subr.mxu0 0.0
        %528 = vmatpush1.xpose.msra.mxu0 0.0
        %529 = vmatprep.subr.mxu0 0.0
        %530 = vmatpush1.xpose.msra.mxu0 0.0
        %531 = vmatprep.subr.mxu0 0.0
        %532 = vmatpush1.xpose.msra.mxu0 0.0
        %533 = vmatprep.subr.mxu0 0.0
        %534 = vmatpush1.xpose.msra.mxu0 0.0
        %535 = vmatprep.subr.mxu0 0.0
        %536 = vmatpush1.xpose.msra.mxu0 0.0
        %537 = vmatprep.subr.mxu0 0.0
        %538 = vmatpush1.xpose.msra.mxu0 0.0
        %539 = vmatprep.subr.mxu0 0.0
        %540 = vmatpush1.xpose.msra.mxu0 0.0
        %541 = vmatprep.subr.mxu0 0.0
        %542 = vmatpush1.xpose.msra.mxu0 0.0
        %543 = vmatprep.subr.mxu0 0.0
        %544 = vmatpush1.xpose.msra.mxu0 0.0
        %545 = vmatprep.subr.mxu0 0.0
        %546 = vmatpush1.xpose.msra.mxu0 0.0
        %547 = vmatprep.subr.mxu0 0.0
        %548 = vmatpush1.xpose.msra.mxu0 0.0
        %549 = vmatprep.subr.mxu0 0.0
        %550 = vmatpush1.xpose.msra.mxu0 0.0
        %551 = vmatprep.subr.mxu0 0.0
        %552 = vmatpush1.xpose.msra.mxu0 0.0
        %553 = vmatprep.subr.mxu0 0.0
        %554 = vmatpush1.xpose.msra.mxu0 0.0
        %555 = vmatprep.subr.mxu0 0.0
        %556 = vmatpush1.xpose.msra.mxu0 0.0
        %557 = vmatprep.subr.mxu0 0.0
        %558 = vmatpush1.xpose.msra.mxu0 0.0
        %559 = vmatprep.subr.mxu0 0.0
        %560 = vmatpush1.xpose.msra.mxu0 0.0
        %561 = vmatprep.subr.mxu0 0.0
        %562 = vmatpush1.xpose.msra.mxu0 0.0
        %563 = vmatprep.subr.mxu0 0.0
        %564 = vmatpush1.xpose.msra.mxu0 0.0
        %565 = vmatprep.mubr.f32.mxu0 0.0
        %566 = vmatmul.mubr.f32.gmra.mrb[0].mxu0 %v497
        %v567 = vpop.f32.mrb[0].mxu0
        %v568 = vadd.f32 0.0, %v567
        %v569 = vpop.f32.mrb[0].mxu0
        %570 = vdwg.mxu0
        %571 = vrot.lane.b32.xlu0 %v489, 96
        %v572 = vpop.permute.xlu0 %571
        %v573 = vsel %vm496, %v489, 0
        %v575 = vsel %vm496, %v572, 0
        %577 = vmatprep.subr.mxu0 0.0
        %578 = vmatpush1.xpose.msra.mxu0 %v575
        %579 = vmatprep.subr.mxu0 0.0
        %580 = vmatpush1.xpose.msra.mxu0 0.0
        %581 = vmatprep.subr.mxu0 0.0
        %582 = vmatpush1.xpose.msra.mxu0 0.0
        %583 = vmatprep.subr.mxu0 0.0
        %584 = vmatpush1.xpose.msra.mxu0 0.0
        %585 = vmatprep.subr.mxu0 0.0
        %586 = vmatpush1.xpose.msra.mxu0 0.0
        %587 = vmatprep.subr.mxu0 0.0
        %588 = vmatpush1.xpose.msra.mxu0 0.0
        %589 = vmatprep.subr.mxu0 0.0
        %590 = vmatpush1.xpose.msra.mxu0 0.0
        %591 = vmatprep.subr.mxu0 0.0
        %592 = vmatpush1.xpose.msra.mxu0 0.0
        %593 = vmatprep.subr.mxu0 0.0
        %594 = vmatpush1.xpose.msra.mxu0 0.0
        %595 = vmatprep.subr.mxu0 0.0
        %596 = vmatpush1.xpose.msra.mxu0 0.0
        %597 = vmatprep.subr.mxu0 0.0
        %598 = vmatpush1.xpose.msra.mxu0 0.0
        %599 = vmatprep.subr.mxu0 0.0
        %600 = vmatpush1.xpose.msra.mxu0 0.0
        %601 = vmatprep.subr.mxu0 0.0
        %602 = vmatpush1.xpose.msra.mxu0 0.0
        %603 = vmatprep.subr.mxu0 0.0
        %604 = vmatpush1.xpose.msra.mxu0 0.0
        %605 = vmatprep.subr.mxu0 0.0
        %606 = vmatpush1.xpose.msra.mxu0 0.0
        %607 = vmatprep.subr.mxu0 0.0
        %608 = vmatpush1.xpose.msra.mxu0 0.0
        %609 = vmatprep.subr.mxu0 0.0
        %610 = vmatpush1.xpose.msra.mxu0 0.0
        %611 = vmatprep.subr.mxu0 0.0
        %612 = vmatpush1.xpose.msra.mxu0 0.0
        %613 = vmatprep.subr.mxu0 0.0
        %614 = vmatpush1.xpose.msra.mxu0 0.0
        %615 = vmatprep.subr.mxu0 0.0
        %616 = vmatpush1.xpose.msra.mxu0 0.0
        %617 = vmatprep.subr.mxu0 0.0
        %618 = vmatpush1.xpose.msra.mxu0 0.0
        %619 = vmatprep.subr.mxu0 0.0
        %620 = vmatpush1.xpose.msra.mxu0 0.0
        %621 = vmatprep.subr.mxu0 0.0
        %622 = vmatpush1.xpose.msra.mxu0 0.0
        %623 = vmatprep.subr.mxu0 0.0
        %624 = vmatpush1.xpose.msra.mxu0 0.0
        %625 = vmatprep.subr.mxu0 0.0
        %626 = vmatpush1.xpose.msra.mxu0 0.0
        %627 = vmatprep.subr.mxu0 0.0
        %628 = vmatpush1.xpose.msra.mxu0 0.0
        %629 = vmatprep.subr.mxu0 0.0
        %630 = vmatpush1.xpose.msra.mxu0 0.0
        %631 = vmatprep.subr.mxu0 0.0
        %632 = vmatpush1.xpose.msra.mxu0 0.0
        %633 = vmatprep.subr.mxu0 0.0
        %634 = vmatpush1.xpose.msra.mxu0 0.0
        %635 = vmatprep.subr.mxu0 0.0
        %636 = vmatpush1.xpose.msra.mxu0 0.0
        %637 = vmatprep.subr.mxu0 0.0
        %638 = vmatpush1.xpose.msra.mxu0 0.0
        %639 = vmatprep.subr.mxu0 0.0
        %640 = vmatpush1.xpose.msra.mxu0 0.0
        %641 = vmatprep.mubr.f32.mxu0 0.0
        %642 = vmatmul.mubr.f32.gmra.mrb[0].mxu0 %v573
        %v643 = vpop.f32.mrb[0].mxu0
        %v644 = vadd.f32 0.0, %v643
        %v645 = vpop.f32.mrb[0].mxu0
        %646 = vdwg.mxu0
        %647 = vrot.lane.b32.xlu0 %v491, 96
        %v648 = vpop.permute.xlu0 %647
        %v649 = vsel %vm496, %v491, 0
        %v651 = vsel %vm496, %v648, 0
        %653 = vmatprep.subr.mxu0 0.0
        %654 = vmatpush1.xpose.msra.mxu0 %v651
        %655 = vmatprep.subr.mxu0 0.0
        %656 = vmatpush1.xpose.msra.mxu0 0.0
        %657 = vmatprep.subr.mxu0 0.0
        %658 = vmatpush1.xpose.msra.mxu0 0.0
        %659 = vmatprep.subr.mxu0 0.0
        %660 = vmatpush1.xpose.msra.mxu0 0.0
        %661 = vmatprep.subr.mxu0 0.0
        %662 = vmatpush1.xpose.msra.mxu0 0.0
        %663 = vmatprep.subr.mxu0 0.0
        %664 = vmatpush1.xpose.msra.mxu0 0.0
        %665 = vmatprep.subr.mxu0 0.0
        %666 = vmatpush1.xpose.msra.mxu0 0.0
        %667 = vmatprep.subr.mxu0 0.0
        %668 = vmatpush1.xpose.msra.mxu0 0.0
        %669 = vmatprep.subr.mxu0 0.0
        %670 = vmatpush1.xpose.msra.mxu0 0.0
        %671 = vmatprep.subr.mxu0 0.0
        %672 = vmatpush1.xpose.msra.mxu0 0.0
        %673 = vmatprep.subr.mxu0 0.0
        %674 = vmatpush1.xpose.msra.mxu0 0.0
        %675 = vmatprep.subr.mxu0 0.0
        %676 = vmatpush1.xpose.msra.mxu0 0.0
        %677 = vmatprep.subr.mxu0 0.0
        %678 = vmatpush1.xpose.msra.mxu0 0.0
        %679 = vmatprep.subr.mxu0 0.0
        %680 = vmatpush1.xpose.msra.mxu0 0.0
        %681 = vmatprep.subr.mxu0 0.0
        %682 = vmatpush1.xpose.msra.mxu0 0.0
        %683 = vmatprep.subr.mxu0 0.0
        %684 = vmatpush1.xpose.msra.mxu0 0.0
        %685 = vmatprep.subr.mxu0 0.0
        %686 = vmatpush1.xpose.msra.mxu0 0.0
        %687 = vmatprep.subr.mxu0 0.0
        %688 = vmatpush1.xpose.msra.mxu0 0.0
        %689 = vmatprep.subr.mxu0 0.0
        %690 = vmatpush1.xpose.msra.mxu0 0.0
        %691 = vmatprep.subr.mxu0 0.0
        %692 = vmatpush1.xpose.msra.mxu0 0.0
        %693 = vmatprep.subr.mxu0 0.0
        %694 = vmatpush1.xpose.msra.mxu0 0.0
        %695 = vmatprep.subr.mxu0 0.0
        %696 = vmatpush1.xpose.msra.mxu0 0.0
        %697 = vmatprep.subr.mxu0 0.0
        %698 = vmatpush1.xpose.msra.mxu0 0.0
        %699 = vmatprep.subr.mxu0 0.0
        %700 = vmatpush1.xpose.msra.mxu0 0.0
        %701 = vmatprep.subr.mxu0 0.0
        %702 = vmatpush1.xpose.msra.mxu0 0.0
        %703 = vmatprep.subr.mxu0 0.0
        %704 = vmatpush1.xpose.msra.mxu0 0.0
        %705 = vmatprep.subr.mxu0 0.0
        %706 = vmatpush1.xpose.msra.mxu0 0.0
        %707 = vmatprep.subr.mxu0 0.0
        %708 = vmatpush1.xpose.msra.mxu0 0.0
        %709 = vmatprep.subr.mxu0 0.0
        %710 = vmatpush1.xpose.msra.mxu0 0.0
        %711 = vmatprep.subr.mxu0 0.0
        %712 = vmatpush1.xpose.msra.mxu0 0.0
        %713 = vmatprep.subr.mxu0 0.0
        %714 = vmatpush1.xpose.msra.mxu0 0.0
        %715 = vmatprep.subr.mxu0 0.0
        %716 = vmatpush1.xpose.msra.mxu0 0.0
        %717 = vmatprep.mubr.f32.mxu0 0.0
        %718 = vmatmul.mubr.f32.gmra.mrb[0].mxu0 %v649
        %v719 = vpop.f32.mrb[0].mxu0
        %v720 = vadd.f32 0.0, %v719
        %v721 = vpop.f32.mrb[0].mxu0
        %722 = vdwg.mxu0
        %723 = vrot.lane.b32.xlu0 %v493, 96
        %v724 = vpop.permute.xlu0 %723
        %v725 = vsel %vm496, %v493, 0
        %v727 = vsel %vm496, %v724, 0
        %729 = vmatprep.subr.mxu0 0.0
        %730 = vmatpush1.xpose.msra.mxu0 %v727
        %731 = vmatprep.subr.mxu0 0.0
        %732 = vmatpush1.xpose.msra.mxu0 0.0
        %733 = vmatprep.subr.mxu0 0.0
        %734 = vmatpush1.xpose.msra.mxu0 0.0
        %735 = vmatprep.subr.mxu0 0.0
        %736 = vmatpush1.xpose.msra.mxu0 0.0
        %737 = vmatprep.subr.mxu0 0.0
        %738 = vmatpush1.xpose.msra.mxu0 0.0
        %739 = vmatprep.subr.mxu0 0.0
        %740 = vmatpush1.xpose.msra.mxu0 0.0
        %741 = vmatprep.subr.mxu0 0.0
        %742 = vmatpush1.xpose.msra.mxu0 0.0
        %743 = vmatprep.subr.mxu0 0.0
        %744 = vmatpush1.xpose.msra.mxu0 0.0
        %745 = vmatprep.subr.mxu0 0.0
        %746 = vmatpush1.xpose.msra.mxu0 0.0
        %747 = vmatprep.subr.mxu0 0.0
        %748 = vmatpush1.xpose.msra.mxu0 0.0
        %749 = vmatprep.subr.mxu0 0.0
        %750 = vmatpush1.xpose.msra.mxu0 0.0
        %751 = vmatprep.subr.mxu0 0.0
        %752 = vmatpush1.xpose.msra.mxu0 0.0
        %753 = vmatprep.subr.mxu0 0.0
        %754 = vmatpush1.xpose.msra.mxu0 0.0
        %755 = vmatprep.subr.mxu0 0.0
        %756 = vmatpush1.xpose.msra.mxu0 0.0
        %757 = vmatprep.subr.mxu0 0.0
        %758 = vmatpush1.xpose.msra.mxu0 0.0
        %759 = vmatprep.subr.mxu0 0.0
        %760 = vmatpush1.xpose.msra.mxu0 0.0
        %761 = vmatprep.subr.mxu0 0.0
        %762 = vmatpush1.xpose.msra.mxu0 0.0
        %763 = vmatprep.subr.mxu0 0.0
        %764 = vmatpush1.xpose.msra.mxu0 0.0
        %765 = vmatprep.subr.mxu0 0.0
        %766 = vmatpush1.xpose.msra.mxu0 0.0
        %767 = vmatprep.subr.mxu0 0.0
        %768 = vmatpush1.xpose.msra.mxu0 0.0
        %769 = vmatprep.subr.mxu0 0.0
        %770 = vmatpush1.xpose.msra.mxu0 0.0
        %771 = vmatprep.subr.mxu0 0.0
        %772 = vmatpush1.xpose.msra.mxu0 0.0
        %773 = vmatprep.subr.mxu0 0.0
        %774 = vmatpush1.xpose.msra.mxu0 0.0
        %775 = vmatprep.subr.mxu0 0.0
        %776 = vmatpush1.xpose.msra.mxu0 0.0
        %777 = vmatprep.subr.mxu0 0.0
        %778 = vmatpush1.xpose.msra.mxu0 0.0
        %779 = vmatprep.subr.mxu0 0.0
        %780 = vmatpush1.xpose.msra.mxu0 0.0
        %781 = vmatprep.subr.mxu0 0.0
        %782 = vmatpush1.xpose.msra.mxu0 0.0
        %783 = vmatprep.subr.mxu0 0.0
        %784 = vmatpush1.xpose.msra.mxu0 0.0
        %785 = vmatprep.subr.mxu0 0.0
        %786 = vmatpush1.xpose.msra.mxu0 0.0
        %787 = vmatprep.subr.mxu0 0.0
        %788 = vmatpush1.xpose.msra.mxu0 0.0
        %789 = vmatprep.subr.mxu0 0.0
        %790 = vmatpush1.xpose.msra.mxu0 0.0
        %791 = vmatprep.subr.mxu0 0.0
        %792 = vmatpush1.xpose.msra.mxu0 0.0
        %793 = vmatprep.mubr.f32.mxu0 0.0
        %794 = vmatmul.mubr.f32.gmra.mrb[0].mxu0 %v725
        %v795 = vpop.f32.mrb[0].mxu0
        %v796 = vadd.f32 0.0, %v795
        %v797 = vpop.f32.mrb[0].mxu0
        %798 = vdwg.mxu0
        %v799 = vmul.f32 %v568, 0.35355338
        %v800 = vmul.f32 %v644, 0.35355338
        %v801 = vmul.f32 %v720, 0.35355338
        %v802 = vmul.f32 %v796, 0.35355338
        %vm803 = vcmp.eq.f32.partialorder %v486, 0.0
        %v804 = vsel %vm803, 1, 0
        %vm805 = vcmp.eq.s32.totalorder %v804, 1
        %v806 = vsel %vm805, -inf, %v799
        %v807 = vsel %vm805, -inf, %v800
        %v808 = vsel %vm805, -inf, %v801
        %v809 = vsel %vm805, -inf, %v802
        %v810 = vsel %vm496, %v806, -inf
        %811 = vmax.xlane.f32.xlu0 %v810
        %v812 = vpop.xlane.xlu0 %811
        %v813 = vsel %vm496, %v807, -inf
        %814 = vmax.xlane.f32.xlu0 %v813
        %v815 = vpop.xlane.xlu0 %814
        %v816 = vsel %vm496, %v808, -inf
        %817 = vmax.xlane.f32.xlu0 %v816
        %v818 = vpop.xlane.xlu0 %817
        %v819 = vsel %vm496, %v809, -inf
        %820 = vmax.xlane.f32.xlu0 %v819
        %v821 = vpop.xlane.xlu0 %820
        %v822 = vsub.f32 %v806, %v812
        %v823 = vsub.f32 %v807, %v815
        %v824 = vsub.f32 %v808, %v818
        %v825 = vsub.f32 %v809, %v821
        %v826 = vmul.f32 %v822, 1.442695
        %v827 = vpow.pop %v826
        %v828 = vmul.f32 %v823, 1.442695
        %v829 = vpow.pop %v828
        %v830 = vmul.f32 %v824, 1.442695
        %v831 = vpow.pop %v830
        %v832 = vmul.f32 %v825, 1.442695
        %v833 = vpow.pop %v832
        %v834 = vsel %vm496, %v827, 0.0
        %835 = vadd.xlane.f32.xlu0 %v834
        %v836 = vpop.xlane.xlu0 %835
        %v837 = vsel %vm496, %v829, 0.0
        %838 = vadd.xlane.f32.xlu0 %v837
        %v839 = vpop.xlane.xlu0 %838
        %v840 = vsel %vm496, %v831, 0.0
        %841 = vadd.xlane.f32.xlu0 %v840
        %v842 = vpop.xlane.xlu0 %841
        %v843 = vsel %vm496, %v833, 0.0
        %844 = vadd.xlane.f32.xlu0 %v843
        %v845 = vpop.xlane.xlu0 %844
        %v846 = vrcp.pop %v836
        %v847 = vrcp.pop %v839
        %v848 = vrcp.pop %v842
        %v849 = vrcp.pop %v845
        %v850 = vmul.f32 %v827, %v846
        %v851 = vmul.f32 %v829, %v847
        %v852 = vmul.f32 %v831, %v848
        %v853 = vmul.f32 %v833, %v849
        %854 = vrot.lane.b32.xlu0 %v483, 64
        %v855 = vpop.permute.xlu0 %854
        %v858 = vsel %vm496, %v850, 0
        %860 = vmatprep.subr.mxu0 0.0
        %861 = vmatpush1.msra.mxu0 %v855
        %862 = vmatprep.subr.mxu0 0.0
        %863 = vmatpush1.msra.mxu0 0.0
        %864 = vmatprep.subr.mxu0 0.0
        %865 = vmatpush1.msra.mxu0 0.0
        %866 = vmatprep.subr.mxu0 0.0
        %867 = vmatpush1.msra.mxu0 0.0
        %868 = vmatprep.subr.mxu0 0.0
        %869 = vmatpush1.msra.mxu0 0.0
        %870 = vmatprep.subr.mxu0 0.0
        %871 = vmatpush1.msra.mxu0 0.0
        %872 = vmatprep.subr.mxu0 0.0
        %873 = vmatpush1.msra.mxu0 0.0
        %874 = vmatprep.subr.mxu0 0.0
        %875 = vmatpush1.msra.mxu0 0.0
        %876 = vmatprep.subr.mxu0 0.0
        %877 = vmatpush1.msra.mxu0 0.0
        %878 = vmatprep.subr.mxu0 0.0
        %879 = vmatpush1.msra.mxu0 0.0
        %880 = vmatprep.subr.mxu0 0.0
        %881 = vmatpush1.msra.mxu0 0.0
        %882 = vmatprep.subr.mxu0 0.0
        %883 = vmatpush1.msra.mxu0 0.0
        %884 = vmatprep.subr.mxu0 0.0
        %885 = vmatpush1.msra.mxu0 0.0
        %886 = vmatprep.subr.mxu0 0.0
        %887 = vmatpush1.msra.mxu0 0.0
        %888 = vmatprep.subr.mxu0 0.0
        %889 = vmatpush1.msra.mxu0 0.0
        %890 = vmatprep.subr.mxu0 0.0
        %891 = vmatpush1.msra.mxu0 0.0
        %892 = vmatprep.subr.mxu0 0.0
        %893 = vmatpush1.msra.mxu0 0.0
        %894 = vmatprep.subr.mxu0 0.0
        %895 = vmatpush1.msra.mxu0 0.0
        %896 = vmatprep.subr.mxu0 0.0
        %897 = vmatpush1.msra.mxu0 0.0
        %898 = vmatprep.subr.mxu0 0.0
        %899 = vmatpush1.msra.mxu0 0.0
        %900 = vmatprep.subr.mxu0 0.0
        %901 = vmatpush1.msra.mxu0 0.0
        %902 = vmatprep.subr.mxu0 0.0
        %903 = vmatpush1.msra.mxu0 0.0
        %904 = vmatprep.subr.mxu0 0.0
        %905 = vmatpush1.msra.mxu0 0.0
        %906 = vmatprep.subr.mxu0 0.0
        %907 = vmatpush1.msra.mxu0 0.0
        %908 = vmatprep.subr.mxu0 0.0
        %909 = vmatpush1.msra.mxu0 0.0
        %910 = vmatprep.subr.mxu0 0.0
        %911 = vmatpush1.msra.mxu0 0.0
        %912 = vmatprep.subr.mxu0 0.0
        %913 = vmatpush1.msra.mxu0 0.0
        %914 = vmatprep.subr.mxu0 0.0
        %915 = vmatpush1.msra.mxu0 0.0
        %916 = vmatprep.subr.mxu0 0.0
        %917 = vmatpush1.msra.mxu0 0.0
        %918 = vmatprep.subr.mxu0 0.0
        %919 = vmatpush1.msra.mxu0 0.0
        %920 = vmatprep.subr.mxu0 0.0
        %921 = vmatpush1.msra.mxu0 0.0
        %922 = vmatprep.subr.mxu0 0.0
        %923 = vmatpush1.msra.mxu0 0.0
        %924 = vmatprep.mubr.f32.mxu0 0.0
        %925 = vmatmul.mubr.f32.gmra.mrb[0].mxu0 %v858
        %v926 = vpop.f32.mrb[0].mxu0
        %v927 = vadd.f32 0.0, %v926
        %v928 = vpop.f32.mrb[0].mxu0
        %929 = vdwg.mxu0
        %930 = vrot.lane.b32.xlu0 %v489, 64
        %v931 = vpop.permute.xlu0 %930
        %v934 = vsel %vm496, %v851, 0
        %936 = vmatprep.subr.mxu0 0.0
        %937 = vmatpush1.msra.mxu0 %v931
        %938 = vmatprep.subr.mxu0 0.0
        %939 = vmatpush1.msra.mxu0 0.0
        %940 = vmatprep.subr.mxu0 0.0
        %941 = vmatpush1.msra.mxu0 0.0
        %942 = vmatprep.subr.mxu0 0.0
        %943 = vmatpush1.msra.mxu0 0.0
        %944 = vmatprep.subr.mxu0 0.0
        %945 = vmatpush1.msra.mxu0 0.0
        %946 = vmatprep.subr.mxu0 0.0
        %947 = vmatpush1.msra.mxu0 0.0
        %948 = vmatprep.subr.mxu0 0.0
        %949 = vmatpush1.msra.mxu0 0.0
        %950 = vmatprep.subr.mxu0 0.0
        %951 = vmatpush1.msra.mxu0 0.0
        %952 = vmatprep.subr.mxu0 0.0
        %953 = vmatpush1.msra.mxu0 0.0
        %954 = vmatprep.subr.mxu0 0.0
        %955 = vmatpush1.msra.mxu0 0.0
        %956 = vmatprep.subr.mxu0 0.0
        %957 = vmatpush1.msra.mxu0 0.0
        %958 = vmatprep.subr.mxu0 0.0
        %959 = vmatpush1.msra.mxu0 0.0
        %960 = vmatprep.subr.mxu0 0.0
        %961 = vmatpush1.msra.mxu0 0.0
        %962 = vmatprep.subr.mxu0 0.0
        %963 = vmatpush1.msra.mxu0 0.0
        %964 = vmatprep.subr.mxu0 0.0
        %965 = vmatpush1.msra.mxu0 0.0
        %966 = vmatprep.subr.mxu0 0.0
        %967 = vmatpush1.msra.mxu0 0.0
        %968 = vmatprep.subr.mxu0 0.0
        %969 = vmatpush1.msra.mxu0 0.0
        %970 = vmatprep.subr.mxu0 0.0
        %971 = vmatpush1.msra.mxu0 0.0
        %972 = vmatprep.subr.mxu0 0.0
        %973 = vmatpush1.msra.mxu0 0.0
        %974 = vmatprep.subr.mxu0 0.0
        %975 = vmatpush1.msra.mxu0 0.0
        %976 = vmatprep.subr.mxu0 0.0
        %977 = vmatpush1.msra.mxu0 0.0
        %978 = vmatprep.subr.mxu0 0.0
        %979 = vmatpush1.msra.mxu0 0.0
        %980 = vmatprep.subr.mxu0 0.0
        %981 = vmatpush1.msra.mxu0 0.0
        %982 = vmatprep.subr.mxu0 0.0
        %983 = vmatpush1.msra.mxu0 0.0
        %984 = vmatprep.subr.mxu0 0.0
        %985 = vmatpush1.msra.mxu0 0.0
        %986 = vmatprep.subr.mxu0 0.0
        %987 = vmatpush1.msra.mxu0 0.0
        %988 = vmatprep.subr.mxu0 0.0
        %989 = vmatpush1.msra.mxu0 0.0
        %990 = vmatprep.subr.mxu0 0.0
        %991 = vmatpush1.msra.mxu0 0.0
        %992 = vmatprep.subr.mxu0 0.0
        %993 = vmatpush1.msra.mxu0 0.0
        %994 = vmatprep.subr.mxu0 0.0
        %995 = vmatpush1.msra.mxu0 0.0
        %996 = vmatprep.subr.mxu0 0.0
        %997 = vmatpush1.msra.mxu0 0.0
        %998 = vmatprep.subr.mxu0 0.0
        %999 = vmatpush1.msra.mxu0 0.0
        %1000 = vmatprep.mubr.f32.mxu0 0.0
        %1001 = vmatmul.mubr.f32.gmra.mrb[0].mxu0 %v934
        %v1002 = vpop.f32.mrb[0].mxu0
        %v1003 = vadd.f32 0.0, %v1002
        %v1004 = vpop.f32.mrb[0].mxu0
        %1005 = vdwg.mxu0
        %1006 = vrot.lane.b32.xlu0 %v491, 64
        %v1007 = vpop.permute.xlu0 %1006
        %v1010 = vsel %vm496, %v852, 0
        %1012 = vmatprep.subr.mxu0 0.0
        %1013 = vmatpush1.msra.mxu0 %v1007
        %1014 = vmatprep.subr.mxu0 0.0
        %1015 = vmatpush1.msra.mxu0 0.0
        %1016 = vmatprep.subr.mxu0 0.0
        %1017 = vmatpush1.msra.mxu0 0.0
        %1018 = vmatprep.subr.mxu0 0.0
        %1019 = vmatpush1.msra.mxu0 0.0
        %1020 = vmatprep.subr.mxu0 0.0
        %1021 = vmatpush1.msra.mxu0 0.0
        %1022 = vmatprep.subr.mxu0 0.0
        %1023 = vmatpush1.msra.mxu0 0.0
        %1024 = vmatprep.subr.mxu0 0.0
        %1025 = vmatpush1.msra.mxu0 0.0
        %1026 = vmatprep.subr.mxu0 0.0
        %1027 = vmatpush1.msra.mxu0 0.0
        %1028 = vmatprep.subr.mxu0 0.0
        %1029 = vmatpush1.msra.mxu0 0.0
        %1030 = vmatprep.subr.mxu0 0.0
        %1031 = vmatpush1.msra.mxu0 0.0
        %1032 = vmatprep.subr.mxu0 0.0
        %1033 = vmatpush1.msra.mxu0 0.0
        %1034 = vmatprep.subr.mxu0 0.0
        %1035 = vmatpush1.msra.mxu0 0.0
        %1036 = vmatprep.subr.mxu0 0.0
        %1037 = vmatpush1.msra.mxu0 0.0
        %1038 = vmatprep.subr.mxu0 0.0
        %1039 = vmatpush1.msra.mxu0 0.0
        %1040 = vmatprep.subr.mxu0 0.0
        %1041 = vmatpush1.msra.mxu0 0.0
        %1042 = vmatprep.subr.mxu0 0.0
        %1043 = vmatpush1.msra.mxu0 0.0
        %1044 = vmatprep.subr.mxu0 0.0
        %1045 = vmatpush1.msra.mxu0 0.0
        %1046 = vmatprep.subr.mxu0 0.0
        %1047 = vmatpush1.msra.mxu0 0.0
        %1048 = vmatprep.subr.mxu0 0.0
        %1049 = vmatpush1.msra.mxu0 0.0
        %1050 = vmatprep.subr.mxu0 0.0
        %1051 = vmatpush1.msra.mxu0 0.0
        %1052 = vmatprep.subr.mxu0 0.0
        %1053 = vmatpush1.msra.mxu0 0.0
        %1054 = vmatprep.subr.mxu0 0.0
        %1055 = vmatpush1.msra.mxu0 0.0
        %1056 = vmatprep.subr.mxu0 0.0
        %1057 = vmatpush1.msra.mxu0 0.0
        %1058 = vmatprep.subr.mxu0 0.0
        %1059 = vmatpush1.msra.mxu0 0.0
        %1060 = vmatprep.subr.mxu0 0.0
        %1061 = vmatpush1.msra.mxu0 0.0
        %1062 = vmatprep.subr.mxu0 0.0
        %1063 = vmatpush1.msra.mxu0 0.0
        %1064 = vmatprep.subr.mxu0 0.0
        %1065 = vmatpush1.msra.mxu0 0.0
        %1066 = vmatprep.subr.mxu0 0.0
        %1067 = vmatpush1.msra.mxu0 0.0
        %1068 = vmatprep.subr.mxu0 0.0
        %1069 = vmatpush1.msra.mxu0 0.0
        %1070 = vmatprep.subr.mxu0 0.0
        %1071 = vmatpush1.msra.mxu0 0.0
        %1072 = vmatprep.subr.mxu0 0.0
        %1073 = vmatpush1.msra.mxu0 0.0
        %1074 = vmatprep.subr.mxu0 0.0
        %1075 = vmatpush1.msra.mxu0 0.0
        %1076 = vmatprep.mubr.f32.mxu0 0.0
        %1077 = vmatmul.mubr.f32.gmra.mrb[0].mxu0 %v1010
        %v1078 = vpop.f32.mrb[0].mxu0
        %v1079 = vadd.f32 0.0, %v1078
        %v1080 = vpop.f32.mrb[0].mxu0
        %1081 = vdwg.mxu0
        %1082 = vrot.lane.b32.xlu0 %v493, 64
        %v1083 = vpop.permute.xlu0 %1082
        %v1086 = vsel %vm496, %v853, 0
        %1088 = vmatprep.subr.mxu0 0.0
        %1089 = vmatpush1.msra.mxu0 %v1083
        %1090 = vmatprep.subr.mxu0 0.0
        %1091 = vmatpush1.msra.mxu0 0.0
        %1092 = vmatprep.subr.mxu0 0.0
        %1093 = vmatpush1.msra.mxu0 0.0
        %1094 = vmatprep.subr.mxu0 0.0
        %1095 = vmatpush1.msra.mxu0 0.0
        %1096 = vmatprep.subr.mxu0 0.0
        %1097 = vmatpush1.msra.mxu0 0.0
        %1098 = vmatprep.subr.mxu0 0.0
        %1099 = vmatpush1.msra.mxu0 0.0
        %1100 = vmatprep.subr.mxu0 0.0
        %1101 = vmatpush1.msra.mxu0 0.0
        %1102 = vmatprep.subr.mxu0 0.0
        %1103 = vmatpush1.msra.mxu0 0.0
        %1104 = vmatprep.subr.mxu0 0.0
        %1105 = vmatpush1.msra.mxu0 0.0
        %1106 = vmatprep.subr.mxu0 0.0
        %1107 = vmatpush1.msra.mxu0 0.0
        %1108 = vmatprep.subr.mxu0 0.0
        %1109 = vmatpush1.msra.mxu0 0.0
        %1110 = vmatprep.subr.mxu0 0.0
        %1111 = vmatpush1.msra.mxu0 0.0
        %1112 = vmatprep.subr.mxu0 0.0
        %1113 = vmatpush1.msra.mxu0 0.0
        %1114 = vmatprep.subr.mxu0 0.0
        %1115 = vmatpush1.msra.mxu0 0.0
        %1116 = vmatprep.subr.mxu0 0.0
        %1117 = vmatpush1.msra.mxu0 0.0
        %1118 = vmatprep.subr.mxu0 0.0
        %1119 = vmatpush1.msra.mxu0 0.0
        %1120 = vmatprep.subr.mxu0 0.0
        %1121 = vmatpush1.msra.mxu0 0.0
        %1122 = vmatprep.subr.mxu0 0.0
        %1123 = vmatpush1.msra.mxu0 0.0
        %1124 = vmatprep.subr.mxu0 0.0
        %1125 = vmatpush1.msra.mxu0 0.0
        %1126 = vmatprep.subr.mxu0 0.0
        %1127 = vmatpush1.msra.mxu0 0.0
        %1128 = vmatprep.subr.mxu0 0.0
        %1129 = vmatpush1.msra.mxu0 0.0
        %1130 = vmatprep.subr.mxu0 0.0
        %1131 = vmatpush1.msra.mxu0 0.0
        %1132 = vmatprep.subr.mxu0 0.0
        %1133 = vmatpush1.msra.mxu0 0.0
        %1134 = vmatprep.subr.mxu0 0.0
        %1135 = vmatpush1.msra.mxu0 0.0
        %1136 = vmatprep.subr.mxu0 0.0
        %1137 = vmatpush1.msra.mxu0 0.0
        %1138 = vmatprep.subr.mxu0 0.0
        %1139 = vmatpush1.msra.mxu0 0.0
        %1140 = vmatprep.subr.mxu0 0.0
        %1141 = vmatpush1.msra.mxu0 0.0
        %1142 = vmatprep.subr.mxu0 0.0
        %1143 = vmatpush1.msra.mxu0 0.0
        %1144 = vmatprep.subr.mxu0 0.0
        %1145 = vmatpush1.msra.mxu0 0.0
        %1146 = vmatprep.subr.mxu0 0.0
        %1147 = vmatpush1.msra.mxu0 0.0
        %1148 = vmatprep.subr.mxu0 0.0
        %1149 = vmatpush1.msra.mxu0 0.0
        %1150 = vmatprep.subr.mxu0 0.0
        %1151 = vmatpush1.msra.mxu0 0.0
        %1152 = vmatprep.mubr.f32.mxu0 0.0
        %1153 = vmatmul.mubr.f32.gmra.mrb[0].mxu0 %v1086
        %v1154 = vpop.f32.mrb[0].mxu0
        %v1155 = vadd.f32 0.0, %v1154
        %v1156 = vpop.f32.mrb[0].mxu0
        %1157 = vdwg.mxu0
        %1159 = vrot.lane.b32.xlu0 %v1003, 8
        %v1160 = vpop.permute.xlu0 %1159
        %1163 = vrot.lane.b32.xlu0 %v1079, 16
        %v1164 = vpop.permute.xlu0 %1163
        %1167 = vrot.lane.b32.xlu0 %v1155, 24
        %v1168 = vpop.permute.xlu0 %1167
        %v1170 = vsel %vm496, %v927, %v1160
        %vm1171 = vcmask 130048
        %v1172 = vsel %vm1171, %v1170, %v1164
        %vm1173 = vcmask 195584
        %v1174 = vsel %vm1173, %v1172, %v1168
        %v1175 = vld [vmem:[#allocation10] sm:$0xff]
        %v1176 = vld [vmem:[#allocation10 + $0x8] sm:$0xff]
        %v1177 = vld [vmem:[#allocation10 + $0x10] sm:$0xff]
        %v1178 = vld [vmem:[#allocation10 + $0x18] sm:$0xff]
        %v1179 = vld [vmem:[%s6] sm:$0x1]
        %v1181 = vlaneseq
        %v1182 = vshrl.u32 %v1181, 7
        %v1183 = vsub.s32 0, %v1182
        %v1184 = vrot.slane %v1179, %v1183
        %v1187 = vsel %vm375, %v1174, 0
        %1189 = vmatprep.subr.mxu0 0.0
        %1190 = vmatpush1.msra.mxu0 %v1175
        %1191 = vmatprep.subr.mxu0 0.0
        %1192 = vmatpush1.msra.mxu0 %v1176
        %1193 = vmatprep.subr.mxu0 0.0
        %1194 = vmatpush1.msra.mxu0 %v1177
        %1195 = vmatprep.subr.mxu0 0.0
        %1196 = vmatpush1.msra.mxu0 %v1178
        %1197 = vmatprep.subr.mxu0 0.0
        %1198 = vmatpush1.msra.mxu0 0.0
        %1199 = vmatprep.subr.mxu0 0.0
        %1200 = vmatpush1.msra.mxu0 0.0
        %1201 = vmatprep.subr.mxu0 0.0
        %1202 = vmatpush1.msra.mxu0 0.0
        %1203 = vmatprep.subr.mxu0 0.0
        %1204 = vmatpush1.msra.mxu0 0.0
        %1205 = vmatprep.subr.mxu0 0.0
        %1206 = vmatpush1.msra.mxu0 0.0
        %1207 = vmatprep.subr.mxu0 0.0
        %1208 = vmatpush1.msra.mxu0 0.0
        %1209 = vmatprep.subr.mxu0 0.0
        %1210 = vmatpush1.msra.mxu0 0.0
        %1211 = vmatprep.subr.mxu0 0.0
        %1212 = vmatpush1.msra.mxu0 0.0
        %1213 = vmatprep.subr.mxu0 0.0
        %1214 = vmatpush1.msra.mxu0 0.0
        %1215 = vmatprep.subr.mxu0 0.0
        %1216 = vmatpush1.msra.mxu0 0.0
        %1217 = vmatprep.subr.mxu0 0.0
        %1218 = vmatpush1.msra.mxu0 0.0
        %1219 = vmatprep.subr.mxu0 0.0
        %1220 = vmatpush1.msra.mxu0 0.0
        %1221 = vmatprep.subr.mxu0 0.0
        %1222 = vmatpush1.msra.mxu0 0.0
        %1223 = vmatprep.subr.mxu0 0.0
        %1224 = vmatpush1.msra.mxu0 0.0
        %1225 = vmatprep.subr.mxu0 0.0
        %1226 = vmatpush1.msra.mxu0 0.0
        %1227 = vmatprep.subr.mxu0 0.0
        %1228 = vmatpush1.msra.mxu0 0.0
        %1229 = vmatprep.subr.mxu0 0.0
        %1230 = vmatpush1.msra.mxu0 0.0
        %1231 = vmatprep.subr.mxu0 0.0
        %1232 = vmatpush1.msra.mxu0 0.0
        %1233 = vmatprep.subr.mxu0 0.0
        %1234 = vmatpush1.msra.mxu0 0.0
        %1235 = vmatprep.subr.mxu0 0.0
        %1236 = vmatpush1.msra.mxu0 0.0
        %1237 = vmatprep.subr.mxu0 0.0
        %1238 = vmatpush1.msra.mxu0 0.0
        %1239 = vmatprep.subr.mxu0 0.0
        %1240 = vmatpush1.msra.mxu0 0.0
        %1241 = vmatprep.subr.mxu0 0.0
        %1242 = vmatpush1.msra.mxu0 0.0
        %1243 = vmatprep.subr.mxu0 0.0
        %1244 = vmatpush1.msra.mxu0 0.0
        %1245 = vmatprep.subr.mxu0 0.0
        %1246 = vmatpush1.msra.mxu0 0.0
        %1247 = vmatprep.subr.mxu0 0.0
        %1248 = vmatpush1.msra.mxu0 0.0
        %1249 = vmatprep.subr.mxu0 0.0
        %1250 = vmatpush1.msra.mxu0 0.0
        %1251 = vmatprep.subr.mxu0 0.0
        %1252 = vmatpush1.msra.mxu0 0.0
        %1253 = vmatprep.mubr.f32.mxu0 0.0
        %1254 = vmatmul.mubr.f32.gmra.mrb[0].mxu0 %v1187
        %v1255 = vpop.f32.mrb[0].mxu0
        %v1256 = vadd.f32 %v1184, %v1255
        %v1257 = vpop.f32.mrb[0].mxu0
        %1258 = vdwg.mxu0
        %v1259 = vadd.f32 %v1256, %v372
        %1260 = vst.msk [vmem:[%s371] sm:$0xff] %vm375, %v1259
        %s1261 = sand.u32 %s194, 1
        %s1262 = scalar_lea.sflag [#allocation4], %s1261
        %s1263 = sand.u32 %s194, 1
        %s1264 = smul.addr %s1263, 8
        %s1265 = scalar_lea.vmem [#allocation12], %s1264
        // Predicated region
        $region69: #{tpu_custom_call.1} parent=47 // pred_check
          %p1266 = pneg %p204
        $region70: #{tpu_custom_call.1} parent=47 // pred_check_branch
          %1268 = sbr.rel (%p1266) target = $region72
        $region71: #{tpu_custom_call.1} parent=47 // pred_region
          %s1270 = ssub.s32 128, 128
          %1271 = vsyncadd %s1262, %s1270
          %s1272 = smul.addr %s29, 128
          %s1273 = scalar_lea.hbm %s7, %s1272
          %s1275 = sshll.u32 %s1265, 4
          %s1276 = int_to_ptr.vmem [resolvable:$true] %s1275
          %1278 = dma.vmem_to_hbm [thread:$0]  %s1276, 128, %s1273, %s1262
        $region72: #{tpu_custom_call.1} parent=47 // pred_fallthru
          _
      $region48: #{tpu_custom_call.1} parent=5 // pred_fallthru
        _
      %p1279 = scmp.le.s32.totalorder 2, %s24
      // Predicated region
      $region73: #{tpu_custom_call.1} parent=5 // pred_check
        %p1280 = pneg %p1279
      $region74: #{tpu_custom_call.1} parent=5 // pred_check_branch
        %1282 = sbr.rel (%p1280) target = $region76
      $region75: #{tpu_custom_call.1} parent=5 // pred_region
        %s1283 = ssub.s32 %s24, 2
        // Predicated region
        $region77: #{tpu_custom_call.1} parent=75 // pred_check
          %p1284 = pneg %p210
        $region78: #{tpu_custom_call.1} parent=75 // pred_check_branch
          %1286 = sbr.rel (%p1284) target = $region80
        $region79: #{tpu_custom_call.1} parent=75 // pred_region
          %s1287 = sand.u32 %s195, 1
          %s1288 = scalar_lea.sflag [#allocation4], %s1287
          %s1289 = sand.u32 %s195, 1
          %s1290 = smul.addr %s1289, 8
          %s1291 = scalar_lea.vmem [#allocation12], %s1290
          %1292 = dma.done %s1288, 128
        $region80: #{tpu_custom_call.1} parent=75 // pred_fallthru
          _
      $region76: #{tpu_custom_call.1} parent=5 // pred_fallthru
        _
    $region6: #{tpu_custom_call.1} parent=1 // loop_footer
      %s28 = sadd.s32 1, %s24
    $region7: #{tpu_custom_call.1} parent=1 // loop_footer_branch
      %23 = sbr.rel target = $region3
    $region8: #{tpu_custom_call.1} parent=1 // loop_exit
      _
    %1293 = vsyncpa [#allocation3], 1
    %s1294 = scalar_lea.sflag [#allocation3], 1
    %1295 = vsyncpa %s1294, 1
    %1296 = vsyncpa [#allocation8], 1
    %s1297 = scalar_lea.sflag [#allocation8], 1
    %1298 = vsyncpa %s1297, 1
    %1299 = vsyncpa [#allocation11], 1
    %1300 = vsyncpa [#allocation4], 1
    %s1301 = scalar_lea.sflag [#allocation4], 1
    %1302 = vsyncpa %s1301, 1
    %1303 = vsyncpa [#allocation5], 1
    %s1304 = scalar_lea.sflag [#allocation5], 1
    %1305 = vsyncpa %s1304, 1

</llo_original>
